<compile_context>
chip_gen: v6e
topology: v6e:2x2x1
jax: 0.10.0
libtpu: 0.0.40
codegen_flags: <defaults>
</compile_context>

<pallas_src>
import functools

import jax
import jax.numpy as jnp
from jax.experimental import pallas as pl
from jax.experimental.pallas import tpu as pltpu

# Logical (PyTorch) dims.
D_IN, D_H1, D_H2, D_H3, D_OUT = 64, 120, 256, 512, 784
# fc1 output lane-padded 120 -> 128 (intermediate only; never leaves VMEM).
D_H1P = 128


def _round_up(n, m):
    return ((n + m - 1) // m) * m


def mlp_kernel(x_ref,
               w1_ref, b1_ref,
               w2_ref, b2_ref,
               w3_ref, b3_ref,
               w4_ref, b4_ref,
               o_ref):
    """Fused 4-layer MLP: (Linear+ReLU) x3 -> Linear -> tanh.

    All matmuls run on the MXU with f32 accumulation (weights / x may be bf16
    or f32); ReLU runs on the VPU and tanh on the EUP.  Intermediates never
    leave VMEM.
    """
    wdt = w1_ref.dtype  # MXU-input dtype; wrapper casts x to match.

    h = jnp.dot(x_ref[...], w1_ref[...], preferred_element_type=jnp.float32)
    h = jnp.maximum(h + b1_ref[...], 0.0)

    h = jnp.dot(h.astype(wdt), w2_ref[...], preferred_element_type=jnp.float32)
    h = jnp.maximum(h + b2_ref[...], 0.0)

    h = jnp.dot(h.astype(wdt), w3_ref[...], preferred_element_type=jnp.float32)
    h = jnp.maximum(h + b3_ref[...], 0.0)

    h = jnp.dot(h.astype(wdt), w4_ref[...], preferred_element_type=jnp.float32)
    o_ref[...] = jnp.tanh(h + b4_ref[...]).astype(o_ref.dtype)


def _default_tile(B):
    b8 = _round_up(B, 8)
    if b8 <= 256:
        return b8        # single tile, single grid step
    if B >= 4096:
        return 512       # still >= 8 grid steps -> pipelines on both v7x TCs
    return 256           # >= 2 grid steps -> megacore-sharded batch tiles


def _vmem_limit_bytes(tb, x_itemsize, out_itemsize, weight_bytes):
    # Double-buffered x / out tiles + pipeline-allocated weight buffers +
    # f32 intermediate activations, with 2x headroom for compiler scratch.
    io = 2 * tb * D_IN * x_itemsize + 2 * tb * D_OUT * out_itemsize
    act = tb * (D_H1P + D_H2 + D_H3 + D_OUT) * 4
    est = io + 2 * weight_bytes + act
    return int(min(56 * 1024 * 1024, 2 * est + (8 << 20)))


@functools.partial(jax.jit, static_argnames=("tb", "out_dtype"))
def mlp_forward(x, packed, tb=None, out_dtype=jnp.float32):
    """x: (B, 64).  packed: output of prepare_params.  Returns (B, 784)."""
    B = x.shape[0]
    tb = _default_tile(B) if tb is None else max(8, _round_up(tb, 8))
    grid = pl.cdiv(B, tb)

    w1, b1 = packed["w1"], packed["b1"]
    w2, b2 = packed["w2"], packed["b2"]
    w3, b3 = packed["w3"], packed["b3"]
    w4, b4 = packed["w4"], packed["b4"]

    # Cast x once in the wrapper (halves x DMA when weights are bf16).
    x = x.astype(w1.dtype)

    weight_bytes = sum(int(a.size) * a.dtype.itemsize
                       for a in (w1, b1, w2, b2, w3, b3, w4, b4))
    out_itemsize = jnp.dtype(out_dtype).itemsize

    cost = pl.CostEstimate(
        flops=2 * B * (D_IN * D_H1P + D_H1P * D_H2 + D_H2 * D_H3 + D_H3 * D_OUT),
        transcendentals=B * D_OUT,
        bytes_accessed=(int(x.size) * x.dtype.itemsize + weight_bytes
                        + B * D_OUT * out_itemsize),
    )

    # Grid-invariant operands (weights / biases): constant index_map -> DMA'd
    # once and resident in VMEM across all batch tiles.  (pipeline_mode=
    # pl.Buffered(1) could drop their second pipeline buffer, but VMEM is not
    # the binding constraint at these tile sizes, so we keep the default.)
    full = lambda shape: pl.BlockSpec(shape, lambda i: (0, 0))

    out = pl.pallas_call(
        mlp_kernel,
        out_shape=jax.ShapeDtypeStruct((B, D_OUT), out_dtype),
        grid_spec=pltpu.PrefetchScalarGridSpec(
            num_scalar_prefetch=0,
            grid=(grid,),
            in_specs=[
                pl.BlockSpec((tb, D_IN), lambda i: (i, 0)),     # x tile
                full((D_IN, D_H1P)),  full((1, D_H1P)),         # fc1 (padded to 128)
                full((D_H1P, D_H2)),  full((1, D_H2)),          # fc2
                full((D_H2, D_H3)),   full((1, D_H3)),          # fc3
                full((D_H3, D_OUT)),  full((1, D_OUT)),         # out (true 784 width)
            ],
            out_specs=pl.BlockSpec((tb, D_OUT), lambda i: (i, 0)),
        ),
        compiler_params=pltpu.CompilerParams(
            dimension_semantics=("parallel",),                  # megacore-shard batch tiles
            vmem_limit_bytes=_vmem_limit_bytes(
                tb, x.dtype.itemsize, out_itemsize, weight_bytes),
        ),
        cost_estimate=cost,
    )(x, w1, b1, w2, b2, w3, b3, w4, b4)
    return out


def prepare_params(params, weight_dtype=jnp.bfloat16):
    """Pad fc1/fc2 to the 128-lane boundary and cast weights to `weight_dtype`.

    bf16 is the default MXU-input dtype (~2x+ MXU throughput and half the
    weight DMA on v5e/v6e/v7x; accumulation stays f32 inside the kernel).
    The padding is mathematically a no-op: padded fc1 columns produce
    relu(0)=0 activations that hit zero-filled rows of fc2.
    """
    def pad_to(a, shape):
        return jnp.pad(a, [(0, t - s) for s, t in zip(a.shape, shape)])

    p = {}
    p["w1"] = pad_to(params["w1"], (D_IN, D_H1P)).astype(weight_dtype)
    p["b1"] = pad_to(params["b1"], (1, D_H1P)).astype(jnp.float32)
    p["w2"] = pad_to(params["w2"], (D_H1P, D_H2)).astype(weight_dtype)
    p["b2"] = params["b2"].astype(jnp.float32)
    p["w3"] = params["w3"].astype(weight_dtype)
    p["b3"] = params["b3"].astype(jnp.float32)
    p["w4"] = params["w4"].astype(weight_dtype)
    p["b4"] = params["b4"].astype(jnp.float32)
    return p


def init_params(key):
    """Deterministic init mimicking nn.Linear default U(-1/sqrt(in), 1/sqrt(in)).

    Weights are stored as (in_features, out_features), i.e. transposed vs.
    PyTorch, so the kernel computes y = x @ W + b == nn.Linear(x).
    """
    params = {}
    dims = [(D_IN, D_H1), (D_H1, D_H2), (D_H2, D_H3), (D_H3, D_OUT)]
    for (din, dout), name in zip(dims, ["1", "2", "3", "4"]):
        key, kw, kb = jax.random.split(key, 3)
        bound = 1.0 / jnp.sqrt(din)
        params[f"w{name}"] = jax.random.uniform(
            kw, (din, dout), jnp.float32, -bound, bound)
        params[f"b{name}"] = jax.random.uniform(
            kb, (1, dout), jnp.float32, -bound, bound)
    return params


def reference_forward(x, params, weight_dtype=jnp.float32):
    """Pure-jnp reference on unpadded params using the same cast scheme."""
    def lin(h, w, b):
        return jnp.dot(h.astype(weight_dtype), w.astype(weight_dtype),
                       preferred_element_type=jnp.float32) + b
    h = jnp.maximum(lin(x, params["w1"], params["b1"]), 0.0)
    h = jnp.maximum(lin(h, params["w2"], params["b2"]), 0.0)
    h = jnp.maximum(lin(h, params["w3"], params["b3"]), 0.0)
    return jnp.tanh(lin(h, params["w4"], params["b4"]))


if __name__ == "__main__":
    key = jax.random.PRNGKey(0)
    kx, kp = jax.random.split(key)
    params = init_params(kp)

    # 1) Small batch, f32 weights: tight numerical check against the reference.
    B = 8
    x = jax.random.normal(kx, (B, D_IN), dtype=jnp.float32)
    p_f32 = prepare_params(params, jnp.float32)
    out = jax.block_until_ready(mlp_forward(x, p_f32))
    ref = reference_forward(x, params, weight_dtype=jnp.float32)
    assert out.shape == (B, D_OUT) and out.dtype == jnp.float32
    assert jnp.allclose(out, ref, atol=1e-5, rtol=1e-5)

    # 2) Default bf16-weight path on a ragged batch: exercises multi-tile grid
    #    (cdiv) with a clipped boundary block and no padding / post-slice.
    B2 = 260
    x2 = jax.random.normal(kx, (B2, D_IN), dtype=jnp.float32)
    p_bf16 = prepare_params(params)                      # bf16 weights (default)
    out2 = jax.block_until_ready(mlp_forward(x2, p_bf16))
    ref2 = reference_forward(x2, params, weight_dtype=jnp.bfloat16)
    assert out2.shape == (B2, D_OUT)
    assert jnp.allclose(out2, ref2, atol=2e-2, rtol=2e-2)

    # 3) Optional bf16 output (halves the dominant HBM writeback).
    out3 = jax.block_until_ready(mlp_forward(x2, p_bf16, out_dtype=jnp.bfloat16))
    assert out3.dtype == jnp.bfloat16
    assert jnp.allclose(out3.astype(jnp.float32), ref2, atol=3e-2, rtol=3e-2)

    print("KERNEL_OK")
</pallas_src>

<mosaic_0001>
module attributes {stable_mosaic.version = 11 : i64} {
  func.func @mlp_kernel(%arg0: i32, %arg1: memref<8x64xf32, #tpu.memory_space<vmem>>, %arg2: memref<64x128xf32, #tpu.memory_space<vmem>>, %arg3: memref<1x128xf32, #tpu.memory_space<vmem>>, %arg4: memref<128x256xf32, #tpu.memory_space<vmem>>, %arg5: memref<1x256xf32, #tpu.memory_space<vmem>>, %arg6: memref<256x512xf32, #tpu.memory_space<vmem>>, %arg7: memref<1x512xf32, #tpu.memory_space<vmem>>, %arg8: memref<512x784xf32, #tpu.memory_space<vmem>>, %arg9: memref<1x784xf32, #tpu.memory_space<vmem>>, %arg10: memref<8x784xf32, #tpu.memory_space<vmem>>) attributes {dimension_semantics = [#tpu.dimension_semantics<parallel>], iteration_bounds = array<i64: 1>, scalar_prefetch = 0 : i64, scratch_operands = 0 : i64, tpu.core_type = #tpu.core_type<tc>, window_params = [{transform_indices = @transform_0, window_bounds = array<i64: 8, 64>}, {pipeline_mode = #tpu.pipeline_mode<synchronous>, transform_indices = @transform_1, window_bounds = array<i64: 64, 128>}, {pipeline_mode = #tpu.pipeline_mode<synchronous>, transform_indices = @transform_2, window_bounds = array<i64: 1, 128>}, {pipeline_mode = #tpu.pipeline_mode<synchronous>, transform_indices = @transform_3, window_bounds = array<i64: 128, 256>}, {pipeline_mode = #tpu.pipeline_mode<synchronous>, transform_indices = @transform_4, window_bounds = array<i64: 1, 256>}, {pipeline_mode = #tpu.pipeline_mode<synchronous>, transform_indices = @transform_5, window_bounds = array<i64: 256, 512>}, {pipeline_mode = #tpu.pipeline_mode<synchronous>, transform_indices = @transform_6, window_bounds = array<i64: 1, 512>}, {pipeline_mode = #tpu.pipeline_mode<synchronous>, transform_indices = @transform_7, window_bounds = array<i64: 512, 784>}, {pipeline_mode = #tpu.pipeline_mode<synchronous>, transform_indices = @transform_8, window_bounds = array<i64: 1, 784>}, {transform_indices = @transform_9, window_bounds = array<i64: 8, 784>}]} {
    %c0 = arith.constant 0 : index
    %c0_0 = arith.constant 0 : index
    %0 = vector.load %arg1[%c0, %c0_0] : memref<8x64xf32, #tpu.memory_space<vmem>>, vector<8x64xf32>
    %c0_1 = arith.constant 0 : index
    %c0_2 = arith.constant 0 : index
    %1 = vector.load %arg2[%c0_1, %c0_2] : memref<64x128xf32, #tpu.memory_space<vmem>>, vector<64x128xf32>
    %cst = arith.constant dense<0.000000e+00> : vector<8x128xf32>
    %2 = tpu.matmul %0, %1, %cst {dimension_numbers = #tpu.dot_dimension_numbers<[1], [0], [0], [1], [0, 0, 1, 1], [], []>} : vector<8x64xf32>, vector<64x128xf32>, vector<8x128xf32> -> vector<8x128xf32>
    %c0_3 = arith.constant 0 : index
    %c0_4 = arith.constant 0 : index
    %3 = vector.load %arg3[%c0_3, %c0_4] : memref<1x128xf32, #tpu.memory_space<vmem>>, vector<1x128xf32>
    %4 = vector.broadcast %3 : vector<1x128xf32> to vector<8x128xf32>
    %5 = arith.addf %2, %4 : vector<8x128xf32>
    %cst_5 = arith.constant 0.000000e+00 : f32
    %6 = vector.broadcast %cst_5 : f32 to vector<8x128xf32>
    %7 = arith.maximumf %5, %6 : vector<8x128xf32>
    %c0_6 = arith.constant 0 : index
    %c0_7 = arith.constant 0 : index
    %8 = vector.load %arg4[%c0_6, %c0_7] : memref<128x256xf32, #tpu.memory_space<vmem>>, vector<128x256xf32>
    %cst_8 = arith.constant dense<0.000000e+00> : vector<8x256xf32>
    %9 = tpu.matmul %7, %8, %cst_8 {dimension_numbers = #tpu.dot_dimension_numbers<[1], [0], [0], [1], [0, 0, 1, 1], [], []>} : vector<8x128xf32>, vector<128x256xf32>, vector<8x256xf32> -> vector<8x256xf32>
    %c0_9 = arith.constant 0 : index
    %c0_10 = arith.constant 0 : index
    %10 = vector.load %arg5[%c0_9, %c0_10] : memref<1x256xf32, #tpu.memory_space<vmem>>, vector<1x256xf32>
    %11 = vector.broadcast %10 : vector<1x256xf32> to vector<8x256xf32>
    %12 = arith.addf %9, %11 : vector<8x256xf32>
    %cst_11 = arith.constant 0.000000e+00 : f32
    %13 = vector.broadcast %cst_11 : f32 to vector<8x256xf32>
    %14 = arith.maximumf %12, %13 : vector<8x256xf32>
    %c0_12 = arith.constant 0 : index
    %c0_13 = arith.constant 0 : index
    %15 = vector.load %arg6[%c0_12, %c0_13] : memref<256x512xf32, #tpu.memory_space<vmem>>, vector<256x512xf32>
    %cst_14 = arith.constant dense<0.000000e+00> : vector<8x512xf32>
    %16 = tpu.matmul %14, %15, %cst_14 {dimension_numbers = #tpu.dot_dimension_numbers<[1], [0], [0], [1], [0, 0, 1, 1], [], []>} : vector<8x256xf32>, vector<256x512xf32>, vector<8x512xf32> -> vector<8x512xf32>
    %c0_15 = arith.constant 0 : index
    %c0_16 = arith.constant 0 : index
    %17 = vector.load %arg7[%c0_15, %c0_16] : memref<1x512xf32, #tpu.memory_space<vmem>>, vector<1x512xf32>
    %18 = vector.broadcast %17 : vector<1x512xf32> to vector<8x512xf32>
    %19 = arith.addf %16, %18 : vector<8x512xf32>
    %cst_17 = arith.constant 0.000000e+00 : f32
    %20 = vector.broadcast %cst_17 : f32 to vector<8x512xf32>
    %21 = arith.maximumf %19, %20 : vector<8x512xf32>
    %c0_18 = arith.constant 0 : index
    %c0_19 = arith.constant 0 : index
    %22 = vector.load %arg8[%c0_18, %c0_19] : memref<512x784xf32, #tpu.memory_space<vmem>>, vector<512x784xf32>
    %cst_20 = arith.constant dense<0.000000e+00> : vector<8x784xf32>
    %23 = tpu.matmul %21, %22, %cst_20 {dimension_numbers = #tpu.dot_dimension_numbers<[1], [0], [0], [1], [0, 0, 1, 1], [], []>} : vector<8x512xf32>, vector<512x784xf32>, vector<8x784xf32> -> vector<8x784xf32>
    %c0_21 = arith.constant 0 : index
    %c0_22 = arith.constant 0 : index
    %24 = vector.load %arg9[%c0_21, %c0_22] : memref<1x784xf32, #tpu.memory_space<vmem>>, vector<1x784xf32>
    %25 = vector.broadcast %24 : vector<1x784xf32> to vector<8x784xf32>
    %26 = arith.addf %23, %25 : vector<8x784xf32>
    %27 = math.tanh %26 : vector<8x784xf32>
    %c0_23 = arith.constant 0 : index
    %c0_24 = arith.constant 0 : index
    %28 = vector.load %arg10[%c0_23, %c0_24] : memref<8x784xf32, #tpu.memory_space<vmem>>, vector<8x784xf32>
    tpu.vector_store %arg10[%c0_23, %c0_24], %27 {strides = array<i32>} : memref<8x784xf32, #tpu.memory_space<vmem>>, vector<8x784xf32>,
    return
  }
  func.func @transform_0(%arg0: i32) -> (i32, i32) {
    %c0_i32 = arith.constant 0 : i32
    %c0_i32_0 = arith.constant 0 : i32
    return %arg0, %c0_i32 : i32, i32
  }
  func.func @transform_1(%arg0: i32) -> (i32, i32) {
    %c0_i32 = arith.constant 0 : i32
    %c0_i32_0 = arith.constant 0 : i32
    %c0_i32_1 = arith.constant 0 : i32
    return %c0_i32, %c0_i32_0 : i32, i32
  }
  func.func @transform_2(%arg0: i32) -> (i32, i32) {
    %c0_i32 = arith.constant 0 : i32
    %c0_i32_0 = arith.constant 0 : i32
    %c0_i32_1 = arith.constant 0 : i32
    return %c0_i32, %c0_i32_0 : i32, i32
  }
  func.func @transform_3(%arg0: i32) -> (i32, i32) {
    %c0_i32 = arith.constant 0 : i32
    %c0_i32_0 = arith.constant 0 : i32
    %c0_i32_1 = arith.constant 0 : i32
    return %c0_i32, %c0_i32_0 : i32, i32
  }
  func.func @transform_4(%arg0: i32) -> (i32, i32) {
    %c0_i32 = arith.constant 0 : i32
    %c0_i32_0 = arith.constant 0 : i32
    %c0_i32_1 = arith.constant 0 : i32
    return %c0_i32, %c0_i32_0 : i32, i32
  }
  func.func @transform_5(%arg0: i32) -> (i32, i32) {
    %c0_i32 = arith.constant 0 : i32
    %c0_i32_0 = arith.constant 0 : i32
    %c0_i32_1 = arith.constant 0 : i32
    return %c0_i32, %c0_i32_0 : i32, i32
  }
  func.func @transform_6(%arg0: i32) -> (i32, i32) {
    %c0_i32 = arith.constant 0 : i32
    %c0_i32_0 = arith.constant 0 : i32
    %c0_i32_1 = arith.constant 0 : i32
    return %c0_i32, %c0_i32_0 : i32, i32
  }
  func.func @transform_7(%arg0: i32) -> (i32, i32) {
    %c0_i32 = arith.constant 0 : i32
    %c0_i32_0 = arith.constant 0 : i32
    %c0_i32_1 = arith.constant 0 : i32
    return %c0_i32, %c0_i32_0 : i32, i32
  }
  func.func @transform_8(%arg0: i32) -> (i32, i32) {
    %c0_i32 = arith.constant 0 : i32
    %c0_i32_0 = arith.constant 0 : i32
    %c0_i32_1 = arith.constant 0 : i32
    return %c0_i32, %c0_i32_0 : i32, i32
  }
  func.func @transform_9(%arg0: i32) -> (i32, i32) {
    %c0_i32 = arith.constant 0 : i32
    %c0_i32_0 = arith.constant 0 : i32
    return %arg0, %c0_i32 : i32, i32
  }
}

</mosaic_0001>

<llo_original>
// kernel: mlp_forward.1
$region0: #{mlp_forward.1}
  #allocation0 [shape = 'u32[]', space=smem, size = 0x4, offset = 0x4, fixed_abs, tag = 'smem constant byte address 0x4 - core index']
  #allocation1 [shape = 'u32[144,128]{1,0:T(1,128)}', space=vmem, size = 0x12000, scoped, tag = 'internal scratch']
  %s0 = inlined_call_operand.vmem [shape: f32[8,64], index: 0, kind: input, shape index: {}]
  %s1 = inlined_call_operand.vmem [shape: f32[64,128], index: 1, kind: input, shape index: {}]
  %s2 = inlined_call_operand.vmem [shape: f32[1,128], index: 2, kind: input, shape index: {}]
  %s3 = inlined_call_operand.vmem [shape: f32[128,256], index: 3, kind: input, shape index: {}]
  %s4 = inlined_call_operand.vmem [shape: f32[1,256], index: 4, kind: input, shape index: {}]
  %s5 = inlined_call_operand.vmem [shape: f32[256,512], index: 5, kind: input, shape index: {}]
  %s6 = inlined_call_operand.vmem [shape: f32[1,512], index: 6, kind: input, shape index: {}]
  %s7 = inlined_call_operand.vmem [shape: f32[512,784], index: 7, kind: input, shape index: {}]
  %s8 = inlined_call_operand.vmem [shape: f32[1,784], index: 8, kind: input, shape index: {}]
  %s9 = inlined_call_operand.hbm [shape: f32[8,784], index: 9, kind: output, shape index: {}]
  %s10 = sld [smem:[#allocation0]]
  $region46: #{mlp_forward.1} parent=0
    _
  %s12 = ssub.s32 1, %s10
  %s13 = scalar_select 0, %s12, %s10
  $region1: #{mlp_forward.1} parent=0
    #allocation2 [shape = 'u8[28672]{0}', space=vmem, size = 0x7000, scoped, tag = 'output window, operand 0, single buffered']
    #allocation3 [shape = 's32[1]{0}', space=sflag, size = 0x4, scoped, tag = 'scoped memory for mlp_forward.1']
    %14 = vsyncpa [#allocation3], 0
    // Predicated region
    $region2: #{mlp_forward.1} parent=1 // pred_check
      _
    $region3: #{mlp_forward.1} parent=1 // pred_check_branch
      %16 = sbr.rel (0) target = $region5
    $region4: #{mlp_forward.1} parent=1 // pred_region
      _
    $region5: #{mlp_forward.1} parent=1 // pred_fallthru
      _
    // Predicated region
    $region6: #{mlp_forward.1} parent=1 // pred_check
      _
    $region7: #{mlp_forward.1} parent=1 // pred_check_branch
      %18 = sbr.rel (0) target = $region9
    $region8: #{mlp_forward.1} parent=1 // pred_region
      _
    $region9: #{mlp_forward.1} parent=1 // pred_fallthru
      _
    // Predicated region
    $region10: #{mlp_forward.1} parent=1 // pred_check
      _
    $region11: #{mlp_forward.1} parent=1 // pred_check_branch
      %20 = sbr.rel (0) target = $region13
    $region12: #{mlp_forward.1} parent=1 // pred_region
      _
    $region13: #{mlp_forward.1} parent=1 // pred_fallthru
      _
    // Predicated region
    $region14: #{mlp_forward.1} parent=1 // pred_check
      _
    $region15: #{mlp_forward.1} parent=1 // pred_check_branch
      %22 = sbr.rel (0) target = $region17
    $region16: #{mlp_forward.1} parent=1 // pred_region
      _
    $region17: #{mlp_forward.1} parent=1 // pred_fallthru
      _
    // Predicated region
    $region18: #{mlp_forward.1} parent=1 // pred_check
      _
    $region19: #{mlp_forward.1} parent=1 // pred_check_branch
      %24 = sbr.rel (0) target = $region21
    $region20: #{mlp_forward.1} parent=1 // pred_region
      _
    $region21: #{mlp_forward.1} parent=1 // pred_fallthru
      _
    // Predicated region
    $region22: #{mlp_forward.1} parent=1 // pred_check
      _
    $region23: #{mlp_forward.1} parent=1 // pred_check_branch
      %26 = sbr.rel (0) target = $region25
    $region24: #{mlp_forward.1} parent=1 // pred_region
      _
    $region25: #{mlp_forward.1} parent=1 // pred_fallthru
      _
    // Predicated region
    $region26: #{mlp_forward.1} parent=1 // pred_check
      _
    $region27: #{mlp_forward.1} parent=1 // pred_check_branch
      %28 = sbr.rel (0) target = $region29
    $region28: #{mlp_forward.1} parent=1 // pred_region
      _
    $region29: #{mlp_forward.1} parent=1 // pred_fallthru
      _
    // Predicated region
    $region30: #{mlp_forward.1} parent=1 // pred_check
      _
    $region31: #{mlp_forward.1} parent=1 // pred_check_branch
      %30 = sbr.rel (0) target = $region33
    $region32: #{mlp_forward.1} parent=1 // pred_region
      _
    $region33: #{mlp_forward.1} parent=1 // pred_fallthru
      _
    // Predicated region
    $region34: #{mlp_forward.1} parent=1 // pred_check
      _
    $region35: #{mlp_forward.1} parent=1 // pred_check_branch
      %32 = sbr.rel (0) target = $region37
    $region36: #{mlp_forward.1} parent=1 // pred_region
      _
    $region37: #{mlp_forward.1} parent=1 // pred_fallthru
      _
    %v33 = vld [vmem:[%s0] sm:$0xff]
    %v34 = vld [vmem:[%s1] sm:$0xff]
    %v35 = vld [vmem:[%s1 + $0x8] sm:$0xff]
    %v36 = vld [vmem:[%s1 + $0x10] sm:$0xff]
    %v37 = vld [vmem:[%s1 + $0x18] sm:$0xff]
    %v38 = vld [vmem:[%s1 + $0x20] sm:$0xff]
    %v39 = vld [vmem:[%s1 + $0x28] sm:$0xff]
    %v40 = vld [vmem:[%s1 + $0x30] sm:$0xff]
    %v41 = vld [vmem:[%s1 + $0x38] sm:$0xff]
    %v42 = vld [vmem:[%s2] sm:$0x1]
    %v44 = vlaneseq
    %v45 = vshrl.u32 %v44, 7
    %v46 = vsub.s32 0, %v45
    %v47 = vrot.slane %v42, %v46
    %vm49 = vcmask 523264
    %v51 = vsel %vm49, %v33, 0
    %53 = vmatprep.subr.mxu0 0.0
    %54 = vmatpush1.msra.mxu0 0.0
    %55 = vmatprep.subr.mxu0 0.0
    %56 = vmatpush1.msra.mxu0 0.0
    %57 = vmatprep.subr.mxu0 0.0
    %58 = vmatpush1.msra.mxu0 0.0
    %59 = vmatprep.subr.mxu0 0.0
    %60 = vmatpush1.msra.mxu0 0.0
    %61 = vmatprep.subr.mxu0 0.0
    %62 = vmatpush1.msra.mxu0 0.0
    %63 = vmatprep.subr.mxu0 0.0
    %64 = vmatpush1.msra.mxu0 0.0
    %65 = vmatprep.subr.mxu0 0.0
    %66 = vmatpush1.msra.mxu0 0.0
    %67 = vmatprep.subr.mxu0 0.0
    %68 = vmatpush1.msra.mxu0 0.0
    %69 = vmatprep.subr.mxu0 0.0
    %70 = vmatpush1.msra.mxu0 %v41
    %71 = vmatprep.subr.mxu0 0.0
    %72 = vmatpush1.msra.mxu0 %v40
    %73 = vmatprep.subr.mxu0 0.0
    %74 = vmatpush1.msra.mxu0 %v39
    %75 = vmatprep.subr.mxu0 0.0
    %76 = vmatpush1.msra.mxu0 %v38
    %77 = vmatprep.subr.mxu0 0.0
    %78 = vmatpush1.msra.mxu0 %v37
    %79 = vmatprep.subr.mxu0 0.0
    %80 = vmatpush1.msra.mxu0 %v36
    %81 = vmatprep.subr.mxu0 0.0
    %82 = vmatpush1.msra.mxu0 %v35
    %83 = vmatprep.subr.mxu0 0.0
    %84 = vmatpush1.msra.mxu0 %v34
    %85 = vmatprep.subr.mxu0 0.0
    %86 = vmatpush2.msra.mxu0 0.0
    %87 = vmatprep.subr.mxu0 0.0
    %88 = vmatpush2.msra.mxu0 0.0
    %89 = vmatprep.subr.mxu0 0.0
    %90 = vmatpush2.msra.mxu0 0.0
    %91 = vmatprep.subr.mxu0 0.0
    %92 = vmatpush2.msra.mxu0 0.0
    %93 = vmatprep.subr.mxu0 0.0
    %94 = vmatpush2.msra.mxu0 0.0
    %95 = vmatprep.subr.mxu0 0.0
    %96 = vmatpush2.msra.mxu0 0.0
    %97 = vmatprep.subr.mxu0 0.0
    %98 = vmatpush2.msra.mxu0 0.0
    %99 = vmatprep.subr.mxu0 0.0
    %100 = vmatpush2.msra.mxu0 0.0
    %101 = vmatprep.subr.mxu0 0.0
    %102 = vmatpush2.msra.mxu0 0.0
    %103 = vmatprep.subr.mxu0 0.0
    %104 = vmatpush2.msra.mxu0 0.0
    %105 = vmatprep.subr.mxu0 0.0
    %106 = vmatpush2.msra.mxu0 0.0
    %107 = vmatprep.subr.mxu0 0.0
    %108 = vmatpush2.msra.mxu0 0.0
    %109 = vmatprep.subr.mxu0 0.0
    %110 = vmatpush2.msra.mxu0 0.0
    %111 = vmatprep.subr.mxu0 0.0
    %112 = vmatpush2.msra.mxu0 0.0
    %113 = vmatprep.subr.mxu0 0.0
    %114 = vmatpush2.msra.mxu0 0.0
    %115 = vmatprep.subr.mxu0 0.0
    %116 = vmatpush2.msra.mxu0 0.0
    %117 = vmatprep.mubr.f32.mxu0 0.0
    %118 = vmatmul.mubr.f32.gmra.mxu0 %v51
    %v119 = vpop.f32.mrf.mxu0
    %v120 = vadd.f32 %v47, %v119
    %v121 = vpop.f32.mrf.mxu0
    %122 = vdwg.mxu0
    %v123 = vmax.f32 %v120, 0.0
    %v124 = vld [vmem:[%s3] sm:$0xff]
    %v125 = vld [vmem:[%s3 + $0x8] sm:$0xff]
    %v126 = vld [vmem:[%s3 + $0x10] sm:$0xff]
    %v127 = vld [vmem:[%s3 + $0x18] sm:$0xff]
    %v128 = vld [vmem:[%s3 + $0x20] sm:$0xff]
    %v129 = vld [vmem:[%s3 + $0x28] sm:$0xff]
    %v130 = vld [vmem:[%s3 + $0x30] sm:$0xff]
    %v131 = vld [vmem:[%s3 + $0x38] sm:$0xff]
    %v132 = vld [vmem:[%s3 + $0x40] sm:$0xff]
    %v133 = vld [vmem:[%s3 + $0x48] sm:$0xff]
    %v134 = vld [vmem:[%s3 + $0x50] sm:$0xff]
    %v135 = vld [vmem:[%s3 + $0x58] sm:$0xff]
    %v136 = vld [vmem:[%s3 + $0x60] sm:$0xff]
    %v137 = vld [vmem:[%s3 + $0x68] sm:$0xff]
    %v138 = vld [vmem:[%s3 + $0x70] sm:$0xff]
    %v139 = vld [vmem:[%s3 + $0x78] sm:$0xff]
    %v140 = vld [vmem:[%s3 + $0x80] sm:$0xff]
    %v141 = vld [vmem:[%s3 + $0x88] sm:$0xff]
    %v142 = vld [vmem:[%s3 + $0x90] sm:$0xff]
    %v143 = vld [vmem:[%s3 + $0x98] sm:$0xff]
    %v144 = vld [vmem:[%s3 + $0xa0] sm:$0xff]
    %v145 = vld [vmem:[%s3 + $0xa8] sm:$0xff]
    %v146 = vld [vmem:[%s3 + $0xb0] sm:$0xff]
    %v147 = vld [vmem:[%s3 + $0xb8] sm:$0xff]
    %v148 = vld [vmem:[%s3 + $0xc0] sm:$0xff]
    %v149 = vld [vmem:[%s3 + $0xc8] sm:$0xff]
    %v150 = vld [vmem:[%s3 + $0xd0] sm:$0xff]
    %v151 = vld [vmem:[%s3 + $0xd8] sm:$0xff]
    %v152 = vld [vmem:[%s3 + $0xe0] sm:$0xff]
    %v153 = vld [vmem:[%s3 + $0xe8] sm:$0xff]
    %v154 = vld [vmem:[%s3 + $0xf0] sm:$0xff]
    %v155 = vld [vmem:[%s3 + $0xf8] sm:$0xff]
    %v156 = vld [vmem:[%s4] sm:$0x3]
    %v158 = vlaneseq
    %v159 = vshrl.u32 %v158, 7
    %v160 = vsub.s32 0, %v159
    %v161 = vrot.slane %v156, %v160
    %v162 = vlaneseq
    %v163 = vshrl.u32 %v162, 7
    %v164 = vsub.s32 1, %v163
    %v165 = vrot.slane %v156, %v164
    %168 = vmatprep.subr.mxu0 %v155
    %169 = vmatpush1.msra.mxu0 %v154
    %170 = vmatprep.subr.mxu0 %v153
    %171 = vmatpush1.msra.mxu0 %v152
    %172 = vmatprep.subr.mxu0 %v151
    %173 = vmatpush1.msra.mxu0 %v150
    %174 = vmatprep.subr.mxu0 %v149
    %175 = vmatpush1.msra.mxu0 %v148
    %176 = vmatprep.subr.mxu0 %v147
    %177 = vmatpush1.msra.mxu0 %v146
    %178 = vmatprep.subr.mxu0 %v145
    %179 = vmatpush1.msra.mxu0 %v144
    %180 = vmatprep.subr.mxu0 %v143
    %181 = vmatpush1.msra.mxu0 %v142
    %182 = vmatprep.subr.mxu0 %v141
    %183 = vmatpush1.msra.mxu0 %v140
    %184 = vmatprep.subr.mxu0 %v139
    %185 = vmatpush1.msra.mxu0 %v138
    %186 = vmatprep.subr.mxu0 %v137
    %187 = vmatpush1.msra.mxu0 %v136
    %188 = vmatprep.subr.mxu0 %v135
    %189 = vmatpush1.msra.mxu0 %v134
    %190 = vmatprep.subr.mxu0 %v133
    %191 = vmatpush1.msra.mxu0 %v132
    %192 = vmatprep.subr.mxu0 %v131
    %193 = vmatpush1.msra.mxu0 %v130
    %194 = vmatprep.subr.mxu0 %v129
    %195 = vmatpush1.msra.mxu0 %v128
    %196 = vmatprep.subr.mxu0 %v127
    %197 = vmatpush1.msra.mxu0 %v126
    %198 = vmatprep.subr.mxu0 %v125
    %199 = vmatpush1.msra.mxu0 %v124
    %200 = vmatprep.subr.mxu0 0.0
    %201 = vmatpush2.msra.mxu0 0.0
    %202 = vmatprep.subr.mxu0 0.0
    %203 = vmatpush2.msra.mxu0 0.0
    %204 = vmatprep.subr.mxu0 0.0
    %205 = vmatpush2.msra.mxu0 0.0
    %206 = vmatprep.subr.mxu0 0.0
    %207 = vmatpush2.msra.mxu0 0.0
    %208 = vmatprep.subr.mxu0 0.0
    %209 = vmatpush2.msra.mxu0 0.0
    %210 = vmatprep.subr.mxu0 0.0
    %211 = vmatpush2.msra.mxu0 0.0
    %212 = vmatprep.subr.mxu0 0.0
    %213 = vmatpush2.msra.mxu0 0.0
    %214 = vmatprep.subr.mxu0 0.0
    %215 = vmatpush2.msra.mxu0 0.0
    %216 = vmatprep.subr.mxu0 0.0
    %217 = vmatpush2.msra.mxu0 0.0
    %218 = vmatprep.subr.mxu0 0.0
    %219 = vmatpush2.msra.mxu0 0.0
    %220 = vmatprep.subr.mxu0 0.0
    %221 = vmatpush2.msra.mxu0 0.0
    %222 = vmatprep.subr.mxu0 0.0
    %223 = vmatpush2.msra.mxu0 0.0
    %224 = vmatprep.subr.mxu0 0.0
    %225 = vmatpush2.msra.mxu0 0.0
    %226 = vmatprep.subr.mxu0 0.0
    %227 = vmatpush2.msra.mxu0 0.0
    %228 = vmatprep.subr.mxu0 0.0
    %229 = vmatpush2.msra.mxu0 0.0
    %230 = vmatprep.subr.mxu0 0.0
    %231 = vmatpush2.msra.mxu0 0.0
    %232 = vmatprep.mubr.f32.mxu0 0.0
    %233 = vmatmul.mubr.f32.gmra.mxu0 %v123
    %v234 = vpop.f32.mrf.mxu0
    %v235 = vadd.f32 %v161, %v234
    %v236 = vpop.f32.mrf.mxu0
    %v237 = vadd.f32 %v165, %v236
    %238 = vdwg.mxu0
    %v239 = vmax.f32 %v235, 0.0
    %v240 = vmax.f32 %v237, 0.0
    %v241 = vld [vmem:[%s5] sm:$0xff]
    %v242 = vld [vmem:[%s5 + $0x8] sm:$0xff]
    %v243 = vld [vmem:[%s5 + $0x10] sm:$0xff]
    %v244 = vld [vmem:[%s5 + $0x18] sm:$0xff]
    %v245 = vld [vmem:[%s5 + $0x20] sm:$0xff]
    %v246 = vld [vmem:[%s5 + $0x28] sm:$0xff]
    %v247 = vld [vmem:[%s5 + $0x30] sm:$0xff]
    %v248 = vld [vmem:[%s5 + $0x38] sm:$0xff]
    %v249 = vld [vmem:[%s5 + $0x40] sm:$0xff]
    %v250 = vld [vmem:[%s5 + $0x48] sm:$0xff]
    %v251 = vld [vmem:[%s5 + $0x50] sm:$0xff]
    %v252 = vld [vmem:[%s5 + $0x58] sm:$0xff]
    %v253 = vld [vmem:[%s5 + $0x60] sm:$0xff]
    %v254 = vld [vmem:[%s5 + $0x68] sm:$0xff]
    %v255 = vld [vmem:[%s5 + $0x70] sm:$0xff]
    %v256 = vld [vmem:[%s5 + $0x78] sm:$0xff]
    %v257 = vld [vmem:[%s5 + $0x80] sm:$0xff]
    %v258 = vld [vmem:[%s5 + $0x88] sm:$0xff]
    %v259 = vld [vmem:[%s5 + $0x90] sm:$0xff]
    %v260 = vld [vmem:[%s5 + $0x98] sm:$0xff]
    %v261 = vld [vmem:[%s5 + $0xa0] sm:$0xff]
    %v262 = vld [vmem:[%s5 + $0xa8] sm:$0xff]
    %v263 = vld [vmem:[%s5 + $0xb0] sm:$0xff]
    %v264 = vld [vmem:[%s5 + $0xb8] sm:$0xff]
    %v265 = vld [vmem:[%s5 + $0xc0] sm:$0xff]
    %v266 = vld [vmem:[%s5 + $0xc8] sm:$0xff]
    %v267 = vld [vmem:[%s5 + $0xd0] sm:$0xff]
    %v268 = vld [vmem:[%s5 + $0xd8] sm:$0xff]
    %v269 = vld [vmem:[%s5 + $0xe0] sm:$0xff]
    %v270 = vld [vmem:[%s5 + $0xe8] sm:$0xff]
    %v271 = vld [vmem:[%s5 + $0xf0] sm:$0xff]
    %v272 = vld [vmem:[%s5 + $0xf8] sm:$0xff]
    %v273 = vld [vmem:[%s5 + $0x100] sm:$0xff]
    %v274 = vld [vmem:[%s5 + $0x108] sm:$0xff]
    %v275 = vld [vmem:[%s5 + $0x110] sm:$0xff]
    %v276 = vld [vmem:[%s5 + $0x118] sm:$0xff]
    %v277 = vld [vmem:[%s5 + $0x120] sm:$0xff]
    %v278 = vld [vmem:[%s5 + $0x128] sm:$0xff]
    %v279 = vld [vmem:[%s5 + $0x130] sm:$0xff]
    %v280 = vld [vmem:[%s5 + $0x138] sm:$0xff]
    %v281 = vld [vmem:[%s5 + $0x140] sm:$0xff]
    %v282 = vld [vmem:[%s5 + $0x148] sm:$0xff]
    %v283 = vld [vmem:[%s5 + $0x150] sm:$0xff]
    %v284 = vld [vmem:[%s5 + $0x158] sm:$0xff]
    %v285 = vld [vmem:[%s5 + $0x160] sm:$0xff]
    %v286 = vld [vmem:[%s5 + $0x168] sm:$0xff]
    %v287 = vld [vmem:[%s5 + $0x170] sm:$0xff]
    %v288 = vld [vmem:[%s5 + $0x178] sm:$0xff]
    %v289 = vld [vmem:[%s5 + $0x180] sm:$0xff]
    %v290 = vld [vmem:[%s5 + $0x188] sm:$0xff]
    %v291 = vld [vmem:[%s5 + $0x190] sm:$0xff]
    %v292 = vld [vmem:[%s5 + $0x198] sm:$0xff]
    %v293 = vld [vmem:[%s5 + $0x1a0] sm:$0xff]
    %v294 = vld [vmem:[%s5 + $0x1a8] sm:$0xff]
    %v295 = vld [vmem:[%s5 + $0x1b0] sm:$0xff]
    %v296 = vld [vmem:[%s5 + $0x1b8] sm:$0xff]
    %v297 = vld [vmem:[%s5 + $0x1c0] sm:$0xff]
    %v298 = vld [vmem:[%s5 + $0x1c8] sm:$0xff]
    %v299 = vld [vmem:[%s5 + $0x1d0] sm:$0xff]
    %v300 = vld [vmem:[%s5 + $0x1d8] sm:$0xff]
    %v301 = vld [vmem:[%s5 + $0x1e0] sm:$0xff]
    %v302 = vld [vmem:[%s5 + $0x1e8] sm:$0xff]
    %v303 = vld [vmem:[%s5 + $0x1f0] sm:$0xff]
    %v304 = vld [vmem:[%s5 + $0x1f8] sm:$0xff]
    %v305 = vld [vmem:[%s5 + $0x200] sm:$0xff]
    %v306 = vld [vmem:[%s5 + $0x208] sm:$0xff]
    %v307 = vld [vmem:[%s5 + $0x210] sm:$0xff]
    %v308 = vld [vmem:[%s5 + $0x218] sm:$0xff]
    %v309 = vld [vmem:[%s5 + $0x220] sm:$0xff]
    %v310 = vld [vmem:[%s5 + $0x228] sm:$0xff]
    %v311 = vld [vmem:[%s5 + $0x230] sm:$0xff]
    %v312 = vld [vmem:[%s5 + $0x238] sm:$0xff]
    %v313 = vld [vmem:[%s5 + $0x240] sm:$0xff]
    %v314 = vld [vmem:[%s5 + $0x248] sm:$0xff]
    %v315 = vld [vmem:[%s5 + $0x250] sm:$0xff]
    %v316 = vld [vmem:[%s5 + $0x258] sm:$0xff]
    %v317 = vld [vmem:[%s5 + $0x260] sm:$0xff]
    %v318 = vld [vmem:[%s5 + $0x268] sm:$0xff]
    %v319 = vld [vmem:[%s5 + $0x270] sm:$0xff]
    %v320 = vld [vmem:[%s5 + $0x278] sm:$0xff]
    %v321 = vld [vmem:[%s5 + $0x280] sm:$0xff]
    %v322 = vld [vmem:[%s5 + $0x288] sm:$0xff]
    %v323 = vld [vmem:[%s5 + $0x290] sm:$0xff]
    %v324 = vld [vmem:[%s5 + $0x298] sm:$0xff]
    %v325 = vld [vmem:[%s5 + $0x2a0] sm:$0xff]
    %v326 = vld [vmem:[%s5 + $0x2a8] sm:$0xff]
    %v327 = vld [vmem:[%s5 + $0x2b0] sm:$0xff]
    %v328 = vld [vmem:[%s5 + $0x2b8] sm:$0xff]
    %v329 = vld [vmem:[%s5 + $0x2c0] sm:$0xff]
    %v330 = vld [vmem:[%s5 + $0x2c8] sm:$0xff]
    %v331 = vld [vmem:[%s5 + $0x2d0] sm:$0xff]
    %v332 = vld [vmem:[%s5 + $0x2d8] sm:$0xff]
    %v333 = vld [vmem:[%s5 + $0x2e0] sm:$0xff]
    %v334 = vld [vmem:[%s5 + $0x2e8] sm:$0xff]
    %v335 = vld [vmem:[%s5 + $0x2f0] sm:$0xff]
    %v336 = vld [vmem:[%s5 + $0x2f8] sm:$0xff]
    %v337 = vld [vmem:[%s5 + $0x300] sm:$0xff]
    %v338 = vld [vmem:[%s5 + $0x308] sm:$0xff]
    %v339 = vld [vmem:[%s5 + $0x310] sm:$0xff]
    %v340 = vld [vmem:[%s5 + $0x318] sm:$0xff]
    %v341 = vld [vmem:[%s5 + $0x320] sm:$0xff]
    %v342 = vld [vmem:[%s5 + $0x328] sm:$0xff]
    %v343 = vld [vmem:[%s5 + $0x330] sm:$0xff]
    %v344 = vld [vmem:[%s5 + $0x338] sm:$0xff]
    %v345 = vld [vmem:[%s5 + $0x340] sm:$0xff]
    %v346 = vld [vmem:[%s5 + $0x348] sm:$0xff]
    %v347 = vld [vmem:[%s5 + $0x350] sm:$0xff]
    %v348 = vld [vmem:[%s5 + $0x358] sm:$0xff]
    %v349 = vld [vmem:[%s5 + $0x360] sm:$0xff]
    %v350 = vld [vmem:[%s5 + $0x368] sm:$0xff]
    %v351 = vld [vmem:[%s5 + $0x370] sm:$0xff]
    %v352 = vld [vmem:[%s5 + $0x378] sm:$0xff]
    %v353 = vld [vmem:[%s5 + $0x380] sm:$0xff]
    %v354 = vld [vmem:[%s5 + $0x388] sm:$0xff]
    %v355 = vld [vmem:[%s5 + $0x390] sm:$0xff]
    %v356 = vld [vmem:[%s5 + $0x398] sm:$0xff]
    %v357 = vld [vmem:[%s5 + $0x3a0] sm:$0xff]
    %v358 = vld [vmem:[%s5 + $0x3a8] sm:$0xff]
    %v359 = vld [vmem:[%s5 + $0x3b0] sm:$0xff]
    %v360 = vld [vmem:[%s5 + $0x3b8] sm:$0xff]
    %v361 = vld [vmem:[%s5 + $0x3c0] sm:$0xff]
    %v362 = vld [vmem:[%s5 + $0x3c8] sm:$0xff]
    %v363 = vld [vmem:[%s5 + $0x3d0] sm:$0xff]
    %v364 = vld [vmem:[%s5 + $0x3d8] sm:$0xff]
    %v365 = vld [vmem:[%s5 + $0x3e0] sm:$0xff]
    %v366 = vld [vmem:[%s5 + $0x3e8] sm:$0xff]
    %v367 = vld [vmem:[%s5 + $0x3f0] sm:$0xff]
    %v368 = vld [vmem:[%s5 + $0x3f8] sm:$0xff]
    %v369 = vld [vmem:[%s6] sm:$0xf]
    %v371 = vlaneseq
    %v372 = vshrl.u32 %v371, 7
    %v373 = vsub.s32 0, %v372
    %v374 = vrot.slane %v369, %v373
    %v375 = vlaneseq
    %v376 = vshrl.u32 %v375, 7
    %v377 = vsub.s32 1, %v376
    %v378 = vrot.slane %v369, %v377
    %v379 = vlaneseq
    %v380 = vshrl.u32 %v379, 7
    %v381 = vsub.s32 2, %v380
    %v382 = vrot.slane %v369, %v381
    %v383 = vlaneseq
    %v384 = vshrl.u32 %v383, 7
    %v385 = vsub.s32 3, %v384
    %v386 = vrot.slane %v369, %v385
    %391 = vmatprep.subr.mxu0 %v302
    %392 = vmatpush1.msra.mxu0 %v301
    %393 = vmatprep.subr.mxu0 %v298
    %394 = vmatpush1.msra.mxu0 %v297
    %395 = vmatprep.subr.mxu0 %v294
    %396 = vmatpush1.msra.mxu0 %v293
    %397 = vmatprep.subr.mxu0 %v290
    %398 = vmatpush1.msra.mxu0 %v289
    %399 = vmatprep.subr.mxu0 %v286
    %400 = vmatpush1.msra.mxu0 %v285
    %401 = vmatprep.subr.mxu0 %v282
    %402 = vmatpush1.msra.mxu0 %v281
    %403 = vmatprep.subr.mxu0 %v278
    %404 = vmatpush1.msra.mxu0 %v277
    %405 = vmatprep.subr.mxu0 %v274
    %406 = vmatpush1.msra.mxu0 %v273
    %407 = vmatprep.subr.mxu0 %v270
    %408 = vmatpush1.msra.mxu0 %v269
    %409 = vmatprep.subr.mxu0 %v266
    %410 = vmatpush1.msra.mxu0 %v265
    %411 = vmatprep.subr.mxu0 %v262
    %412 = vmatpush1.msra.mxu0 %v261
    %413 = vmatprep.subr.mxu0 %v258
    %414 = vmatpush1.msra.mxu0 %v257
    %415 = vmatprep.subr.mxu0 %v254
    %416 = vmatpush1.msra.mxu0 %v253
    %417 = vmatprep.subr.mxu0 %v250
    %418 = vmatpush1.msra.mxu0 %v249
    %419 = vmatprep.subr.mxu0 %v246
    %420 = vmatpush1.msra.mxu0 %v245
    %421 = vmatprep.subr.mxu0 %v242
    %422 = vmatpush1.msra.mxu0 %v241
    %423 = vmatprep.subr.mxu0 %v366
    %424 = vmatpush2.msra.mxu0 %v365
    %425 = vmatprep.subr.mxu0 %v362
    %426 = vmatpush2.msra.mxu0 %v361
    %427 = vmatprep.subr.mxu0 %v358
    %428 = vmatpush2.msra.mxu0 %v357
    %429 = vmatprep.subr.mxu0 %v354
    %430 = vmatpush2.msra.mxu0 %v353
    %431 = vmatprep.subr.mxu0 %v350
    %432 = vmatpush2.msra.mxu0 %v349
    %433 = vmatprep.subr.mxu0 %v346
    %434 = vmatpush2.msra.mxu0 %v345
    %435 = vmatprep.subr.mxu0 %v342
    %436 = vmatpush2.msra.mxu0 %v341
    %437 = vmatprep.subr.mxu0 %v338
    %438 = vmatpush2.msra.mxu0 %v337
    %439 = vmatprep.subr.mxu0 %v334
    %440 = vmatpush2.msra.mxu0 %v333
    %441 = vmatprep.subr.mxu0 %v330
    %442 = vmatpush2.msra.mxu0 %v329
    %443 = vmatprep.subr.mxu0 %v326
    %444 = vmatpush2.msra.mxu0 %v325
    %445 = vmatprep.subr.mxu0 %v322
    %446 = vmatpush2.msra.mxu0 %v321
    %447 = vmatprep.subr.mxu0 %v318
    %448 = vmatpush2.msra.mxu0 %v317
    %449 = vmatprep.subr.mxu0 %v314
    %450 = vmatpush2.msra.mxu0 %v313
    %451 = vmatprep.subr.mxu0 %v310
    %452 = vmatpush2.msra.mxu0 %v309
    %453 = vmatprep.subr.mxu0 %v306
    %454 = vmatpush2.msra.mxu0 %v305
    %455 = vmatprep.mubr.f32.mxu0 %v240
    %456 = vmatmul.mubr.f32.gmra.mxu0 %v239
    %v457 = vpop.f32.mrf.mxu0
    %v458 = vadd.f32 %v374, %v457
    %v459 = vpop.f32.mrf.mxu0
    %v460 = vadd.f32 %v378, %v459
    %461 = vdwg.mxu0
    %462 = vmatprep.subr.mxu0 %v304
    %463 = vmatpush1.msra.mxu0 %v303
    %464 = vmatprep.subr.mxu0 %v300
    %465 = vmatpush1.msra.mxu0 %v299
    %466 = vmatprep.subr.mxu0 %v296
    %467 = vmatpush1.msra.mxu0 %v295
    %468 = vmatprep.subr.mxu0 %v292
    %469 = vmatpush1.msra.mxu0 %v291
    %470 = vmatprep.subr.mxu0 %v288
    %471 = vmatpush1.msra.mxu0 %v287
    %472 = vmatprep.subr.mxu0 %v284
    %473 = vmatpush1.msra.mxu0 %v283
    %474 = vmatprep.subr.mxu0 %v280
    %475 = vmatpush1.msra.mxu0 %v279
    %476 = vmatprep.subr.mxu0 %v276
    %477 = vmatpush1.msra.mxu0 %v275
    %478 = vmatprep.subr.mxu0 %v272
    %479 = vmatpush1.msra.mxu0 %v271
    %480 = vmatprep.subr.mxu0 %v268
    %481 = vmatpush1.msra.mxu0 %v267
    %482 = vmatprep.subr.mxu0 %v264
    %483 = vmatpush1.msra.mxu0 %v263
    %484 = vmatprep.subr.mxu0 %v260
    %485 = vmatpush1.msra.mxu0 %v259
    %486 = vmatprep.subr.mxu0 %v256
    %487 = vmatpush1.msra.mxu0 %v255
    %488 = vmatprep.subr.mxu0 %v252
    %489 = vmatpush1.msra.mxu0 %v251
    %490 = vmatprep.subr.mxu0 %v248
    %491 = vmatpush1.msra.mxu0 %v247
    %492 = vmatprep.subr.mxu0 %v244
    %493 = vmatpush1.msra.mxu0 %v243
    %494 = vmatprep.subr.mxu0 %v368
    %495 = vmatpush2.msra.mxu0 %v367
    %496 = vmatprep.subr.mxu0 %v364
    %497 = vmatpush2.msra.mxu0 %v363
    %498 = vmatprep.subr.mxu0 %v360
    %499 = vmatpush2.msra.mxu0 %v359
    %500 = vmatprep.subr.mxu0 %v356
    %501 = vmatpush2.msra.mxu0 %v355
    %502 = vmatprep.subr.mxu0 %v352
    %503 = vmatpush2.msra.mxu0 %v351
    %504 = vmatprep.subr.mxu0 %v348
    %505 = vmatpush2.msra.mxu0 %v347
    %506 = vmatprep.subr.mxu0 %v344
    %507 = vmatpush2.msra.mxu0 %v343
    %508 = vmatprep.subr.mxu0 %v340
    %509 = vmatpush2.msra.mxu0 %v339
    %510 = vmatprep.subr.mxu0 %v336
    %511 = vmatpush2.msra.mxu0 %v335
    %512 = vmatprep.subr.mxu0 %v332
    %513 = vmatpush2.msra.mxu0 %v331
    %514 = vmatprep.subr.mxu0 %v328
    %515 = vmatpush2.msra.mxu0 %v327
    %516 = vmatprep.subr.mxu0 %v324
    %517 = vmatpush2.msra.mxu0 %v323
    %518 = vmatprep.subr.mxu0 %v320
    %519 = vmatpush2.msra.mxu0 %v319
    %520 = vmatprep.subr.mxu0 %v316
    %521 = vmatpush2.msra.mxu0 %v315
    %522 = vmatprep.subr.mxu0 %v312
    %523 = vmatpush2.msra.mxu0 %v311
    %524 = vmatprep.subr.mxu0 %v308
    %525 = vmatpush2.msra.mxu0 %v307
    %526 = vmatprep.mubr.f32.mxu0 %v240
    %527 = vmatmul.mubr.f32.gmra.mxu0 %v239
    %v528 = vpop.f32.mrf.mxu0
    %v529 = vadd.f32 %v382, %v528
    %v530 = vpop.f32.mrf.mxu0
    %v531 = vadd.f32 %v386, %v530
    %532 = vdwg.mxu0
    %v533 = vmax.f32 %v458, 0.0
    %v534 = vmax.f32 %v460, 0.0
    %v535 = vmax.f32 %v529, 0.0
    %v536 = vmax.f32 %v531, 0.0
    %v537 = vld [vmem:[%s7] sm:$0xff]
    %v538 = vld [vmem:[%s7 + $0x8] sm:$0xff]
    %v539 = vld [vmem:[%s7 + $0x10] sm:$0xff]
    %v540 = vld [vmem:[%s7 + $0x18] sm:$0xff]
    %v541 = vld [vmem:[%s7 + $0x20] sm:$0xff]
    %v542 = vld [vmem:[%s7 + $0x28] sm:$0xff]
    %v543 = vld [vmem:[%s7 + $0x30] sm:$0xff]
    %v544 = vld [vmem:[%s7 + $0x38] sm:$0xff]
    %v545 = vld [vmem:[%s7 + $0x40] sm:$0xff]
    %v546 = vld [vmem:[%s7 + $0x48] sm:$0xff]
    %v547 = vld [vmem:[%s7 + $0x50] sm:$0xff]
    %v548 = vld [vmem:[%s7 + $0x58] sm:$0xff]
    %v549 = vld [vmem:[%s7 + $0x60] sm:$0xff]
    %v550 = vld [vmem:[%s7 + $0x68] sm:$0xff]
    %v551 = vld [vmem:[%s7 + $0x70] sm:$0xff]
    %v552 = vld [vmem:[%s7 + $0x78] sm:$0xff]
    %v553 = vld [vmem:[%s7 + $0x80] sm:$0xff]
    %v554 = vld [vmem:[%s7 + $0x88] sm:$0xff]
    %v555 = vld [vmem:[%s7 + $0x90] sm:$0xff]
    %v556 = vld [vmem:[%s7 + $0x98] sm:$0xff]
    %v557 = vld [vmem:[%s7 + $0xa0] sm:$0xff]
    %v558 = vld [vmem:[%s7 + $0xa8] sm:$0xff]
    %v559 = vld [vmem:[%s7 + $0xb0] sm:$0xff]
    %v560 = vld [vmem:[%s7 + $0xb8] sm:$0xff]
    %v561 = vld [vmem:[%s7 + $0xc0] sm:$0xff]
    %v562 = vld [vmem:[%s7 + $0xc8] sm:$0xff]
    %v563 = vld [vmem:[%s7 + $0xd0] sm:$0xff]
    %v564 = vld [vmem:[%s7 + $0xd8] sm:$0xff]
    %v565 = vld [vmem:[%s7 + $0xe0] sm:$0xff]
    %v566 = vld [vmem:[%s7 + $0xe8] sm:$0xff]
    %v567 = vld [vmem:[%s7 + $0xf0] sm:$0xff]
    %v568 = vld [vmem:[%s7 + $0xf8] sm:$0xff]
    %v569 = vld [vmem:[%s7 + $0x100] sm:$0xff]
    %v570 = vld [vmem:[%s7 + $0x108] sm:$0xff]
    %v571 = vld [vmem:[%s7 + $0x110] sm:$0xff]
    %v572 = vld [vmem:[%s7 + $0x118] sm:$0xff]
    %v573 = vld [vmem:[%s7 + $0x120] sm:$0xff]
    %v574 = vld [vmem:[%s7 + $0x128] sm:$0xff]
    %v575 = vld [vmem:[%s7 + $0x130] sm:$0xff]
    %v576 = vld [vmem:[%s7 + $0x138] sm:$0xff]
    %v577 = vld [vmem:[%s7 + $0x140] sm:$0xff]
    %v578 = vld [vmem:[%s7 + $0x148] sm:$0xff]
    %v579 = vld [vmem:[%s7 + $0x150] sm:$0xff]
    %v580 = vld [vmem:[%s7 + $0x158] sm:$0xff]
    %v581 = vld [vmem:[%s7 + $0x160] sm:$0xff]
    %v582 = vld [vmem:[%s7 + $0x168] sm:$0xff]
    %v583 = vld [vmem:[%s7 + $0x170] sm:$0xff]
    %v584 = vld [vmem:[%s7 + $0x178] sm:$0xff]
    %v585 = vld [vmem:[%s7 + $0x180] sm:$0xff]
    %v586 = vld [vmem:[%s7 + $0x188] sm:$0xff]
    %v587 = vld [vmem:[%s7 + $0x190] sm:$0xff]
    %v588 = vld [vmem:[%s7 + $0x198] sm:$0xff]
    %v589 = vld [vmem:[%s7 + $0x1a0] sm:$0xff]
    %v590 = vld [vmem:[%s7 + $0x1a8] sm:$0xff]
    %v591 = vld [vmem:[%s7 + $0x1b0] sm:$0xff]
    %v592 = vld [vmem:[%s7 + $0x1b8] sm:$0xff]
    %v593 = vld [vmem:[%s7 + $0x1c0] sm:$0xff]
    %v594 = vld [vmem:[%s7 + $0x1c8] sm:$0xff]
    %v595 = vld [vmem:[%s7 + $0x1d0] sm:$0xff]
    %v596 = vld [vmem:[%s7 + $0x1d8] sm:$0xff]
    %v597 = vld [vmem:[%s7 + $0x1e0] sm:$0xff]
    %v598 = vld [vmem:[%s7 + $0x1e8] sm:$0xff]
    %v599 = vld [vmem:[%s7 + $0x1f0] sm:$0xff]
    %v600 = vld [vmem:[%s7 + $0x1f8] sm:$0xff]
    %v601 = vld [vmem:[%s7 + $0x200] sm:$0xff]
    %v602 = vld [vmem:[%s7 + $0x208] sm:$0xff]
    %v603 = vld [vmem:[%s7 + $0x210] sm:$0xff]
    %v604 = vld [vmem:[%s7 + $0x218] sm:$0xff]
    %v605 = vld [vmem:[%s7 + $0x220] sm:$0xff]
    %v606 = vld [vmem:[%s7 + $0x228] sm:$0xff]
    %v607 = vld [vmem:[%s7 + $0x230] sm:$0xff]
    %v608 = vld [vmem:[%s7 + $0x238] sm:$0xff]
    %v609 = vld [vmem:[%s7 + $0x240] sm:$0xff]
    %v610 = vld [vmem:[%s7 + $0x248] sm:$0xff]
    %v611 = vld [vmem:[%s7 + $0x250] sm:$0xff]
    %v612 = vld [vmem:[%s7 + $0x258] sm:$0xff]
    %v613 = vld [vmem:[%s7 + $0x260] sm:$0xff]
    %v614 = vld [vmem:[%s7 + $0x268] sm:$0xff]
    %v615 = vld [vmem:[%s7 + $0x270] sm:$0xff]
    %v616 = vld [vmem:[%s7 + $0x278] sm:$0xff]
    %v617 = vld [vmem:[%s7 + $0x280] sm:$0xff]
    %v618 = vld [vmem:[%s7 + $0x288] sm:$0xff]
    %v619 = vld [vmem:[%s7 + $0x290] sm:$0xff]
    %v620 = vld [vmem:[%s7 + $0x298] sm:$0xff]
    %v621 = vld [vmem:[%s7 + $0x2a0] sm:$0xff]
    %v622 = vld [vmem:[%s7 + $0x2a8] sm:$0xff]
    %v623 = vld [vmem:[%s7 + $0x2b0] sm:$0xff]
    %v624 = vld [vmem:[%s7 + $0x2b8] sm:$0xff]
    %v625 = vld [vmem:[%s7 + $0x2c0] sm:$0xff]
    %v626 = vld [vmem:[%s7 + $0x2c8] sm:$0xff]
    %v627 = vld [vmem:[%s7 + $0x2d0] sm:$0xff]
    %v628 = vld [vmem:[%s7 + $0x2d8] sm:$0xff]
    %v629 = vld [vmem:[%s7 + $0x2e0] sm:$0xff]
    %v630 = vld [vmem:[%s7 + $0x2e8] sm:$0xff]
    %v631 = vld [vmem:[%s7 + $0x2f0] sm:$0xff]
    %v632 = vld [vmem:[%s7 + $0x2f8] sm:$0xff]
    %v633 = vld [vmem:[%s7 + $0x300] sm:$0xff]
    %v634 = vld [vmem:[%s7 + $0x308] sm:$0xff]
    %v635 = vld [vmem:[%s7 + $0x310] sm:$0xff]
    %v636 = vld [vmem:[%s7 + $0x318] sm:$0xff]
    %v637 = vld [vmem:[%s7 + $0x320] sm:$0xff]
    %v638 = vld [vmem:[%s7 + $0x328] sm:$0xff]
    %v639 = vld [vmem:[%s7 + $0x330] sm:$0xff]
    %v640 = vld [vmem:[%s7 + $0x338] sm:$0xff]
    %v641 = vld [vmem:[%s7 + $0x340] sm:$0xff]
    %v642 = vld [vmem:[%s7 + $0x348] sm:$0xff]
    %v643 = vld [vmem:[%s7 + $0x350] sm:$0xff]
    %v644 = vld [vmem:[%s7 + $0x358] sm:$0xff]
    %v645 = vld [vmem:[%s7 + $0x360] sm:$0xff]
    %v646 = vld [vmem:[%s7 + $0x368] sm:$0xff]
    %v647 = vld [vmem:[%s7 + $0x370] sm:$0xff]
    %v648 = vld [vmem:[%s7 + $0x378] sm:$0xff]
    %v649 = vld [vmem:[%s7 + $0x380] sm:$0xff]
    %v650 = vld [vmem:[%s7 + $0x388] sm:$0xff]
    %v651 = vld [vmem:[%s7 + $0x390] sm:$0xff]
    %v652 = vld [vmem:[%s7 + $0x398] sm:$0xff]
    %v653 = vld [vmem:[%s7 + $0x3a0] sm:$0xff]
    %v654 = vld [vmem:[%s7 + $0x3a8] sm:$0xff]
    %v655 = vld [vmem:[%s7 + $0x3b0] sm:$0xff]
    %v656 = vld [vmem:[%s7 + $0x3b8] sm:$0xff]
    %v657 = vld [vmem:[%s7 + $0x3c0] sm:$0xff]
    %v658 = vld [vmem:[%s7 + $0x3c8] sm:$0xff]
    %v659 = vld [vmem:[%s7 + $0x3d0] sm:$0xff]
    %v660 = vld [vmem:[%s7 + $0x3d8] sm:$0xff]
    %v661 = vld [vmem:[%s7 + $0x3e0] sm:$0xff]
    %v662 = vld [vmem:[%s7 + $0x3e8] sm:$0xff]
    %v663 = vld [vmem:[%s7 + $0x3f0] sm:$0xff]
    %v664 = vld [vmem:[%s7 + $0x3f8] sm:$0xff]
    %v665 = vld [vmem:[%s7 + $0x400] sm:$0xff]
    %v666 = vld [vmem:[%s7 + $0x408] sm:$0xff]
    %v667 = vld [vmem:[%s7 + $0x410] sm:$0xff]
    %v668 = vld [vmem:[%s7 + $0x418] sm:$0xff]
    %v669 = vld [vmem:[%s7 + $0x420] sm:$0xff]
    %v670 = vld [vmem:[%s7 + $0x428] sm:$0xff]
    %v671 = vld [vmem:[%s7 + $0x430] sm:$0xff]
    %v672 = vld [vmem:[%s7 + $0x438] sm:$0xff]
    %v673 = vld [vmem:[%s7 + $0x440] sm:$0xff]
    %v674 = vld [vmem:[%s7 + $0x448] sm:$0xff]
    %v675 = vld [vmem:[%s7 + $0x450] sm:$0xff]
    %v676 = vld [vmem:[%s7 + $0x458] sm:$0xff]
    %v677 = vld [vmem:[%s7 + $0x460] sm:$0xff]
    %v678 = vld [vmem:[%s7 + $0x468] sm:$0xff]
    %v679 = vld [vmem:[%s7 + $0x470] sm:$0xff]
    %v680 = vld [vmem:[%s7 + $0x478] sm:$0xff]
    %v681 = vld [vmem:[%s7 + $0x480] sm:$0xff]
    %v682 = vld [vmem:[%s7 + $0x488] sm:$0xff]
    %v683 = vld [vmem:[%s7 + $0x490] sm:$0xff]
    %v684 = vld [vmem:[%s7 + $0x498] sm:$0xff]
    %v685 = vld [vmem:[%s7 + $0x4a0] sm:$0xff]
    %v686 = vld [vmem:[%s7 + $0x4a8] sm:$0xff]
    %v687 = vld [vmem:[%s7 + $0x4b0] sm:$0xff]
    %v688 = vld [vmem:[%s7 + $0x4b8] sm:$0xff]
    %v689 = vld [vmem:[%s7 + $0x4c0] sm:$0xff]
    %v690 = vld [vmem:[%s7 + $0x4c8] sm:$0xff]
    %v691 = vld [vmem:[%s7 + $0x4d0] sm:$0xff]
    %v692 = vld [vmem:[%s7 + $0x4d8] sm:$0xff]
    %v693 = vld [vmem:[%s7 + $0x4e0] sm:$0xff]
    %v694 = vld [vmem:[%s7 + $0x4e8] sm:$0xff]
    %v695 = vld [vmem:[%s7 + $0x4f0] sm:$0xff]
    %v696 = vld [vmem:[%s7 + $0x4f8] sm:$0xff]
    %v697 = vld [vmem:[%s7 + $0x500] sm:$0xff]
    %v698 = vld [vmem:[%s7 + $0x508] sm:$0xff]
    %v699 = vld [vmem:[%s7 + $0x510] sm:$0xff]
    %v700 = vld [vmem:[%s7 + $0x518] sm:$0xff]
    %v701 = vld [vmem:[%s7 + $0x520] sm:$0xff]
    %v702 = vld [vmem:[%s7 + $0x528] sm:$0xff]
    %v703 = vld [vmem:[%s7 + $0x530] sm:$0xff]
    %v704 = vld [vmem:[%s7 + $0x538] sm:$0xff]
    %v705 = vld [vmem:[%s7 + $0x540] sm:$0xff]
    %v706 = vld [vmem:[%s7 + $0x548] sm:$0xff]
    %v707 = vld [vmem:[%s7 + $0x550] sm:$0xff]
    %v708 = vld [vmem:[%s7 + $0x558] sm:$0xff]
    %v709 = vld [vmem:[%s7 + $0x560] sm:$0xff]
    %v710 = vld [vmem:[%s7 + $0x568] sm:$0xff]
    %v711 = vld [vmem:[%s7 + $0x570] sm:$0xff]
    %v712 = vld [vmem:[%s7 + $0x578] sm:$0xff]
    %v713 = vld [vmem:[%s7 + $0x580] sm:$0xff]
    %v714 = vld [vmem:[%s7 + $0x588] sm:$0xff]
    %v715 = vld [vmem:[%s7 + $0x590] sm:$0xff]
    %v716 = vld [vmem:[%s7 + $0x598] sm:$0xff]
    %v717 = vld [vmem:[%s7 + $0x5a0] sm:$0xff]
    %v718 = vld [vmem:[%s7 + $0x5a8] sm:$0xff]
    %v719 = vld [vmem:[%s7 + $0x5b0] sm:$0xff]
    %v720 = vld [vmem:[%s7 + $0x5b8] sm:$0xff]
    %v721 = vld [vmem:[%s7 + $0x5c0] sm:$0xff]
    %v722 = vld [vmem:[%s7 + $0x5c8] sm:$0xff]
    %v723 = vld [vmem:[%s7 + $0x5d0] sm:$0xff]
    %v724 = vld [vmem:[%s7 + $0x5d8] sm:$0xff]
    %v725 = vld [vmem:[%s7 + $0x5e0] sm:$0xff]
    %v726 = vld [vmem:[%s7 + $0x5e8] sm:$0xff]
    %v727 = vld [vmem:[%s7 + $0x5f0] sm:$0xff]
    %v728 = vld [vmem:[%s7 + $0x5f8] sm:$0xff]
    %v729 = vld [vmem:[%s7 + $0x600] sm:$0xff]
    %v730 = vld [vmem:[%s7 + $0x608] sm:$0xff]
    %v731 = vld [vmem:[%s7 + $0x610] sm:$0xff]
    %v732 = vld [vmem:[%s7 + $0x618] sm:$0xff]
    %v733 = vld [vmem:[%s7 + $0x620] sm:$0xff]
    %v734 = vld [vmem:[%s7 + $0x628] sm:$0xff]
    %v735 = vld [vmem:[%s7 + $0x630] sm:$0xff]
    %v736 = vld [vmem:[%s7 + $0x638] sm:$0xff]
    %v737 = vld [vmem:[%s7 + $0x640] sm:$0xff]
    %v738 = vld [vmem:[%s7 + $0x648] sm:$0xff]
    %v739 = vld [vmem:[%s7 + $0x650] sm:$0xff]
    %v740 = vld [vmem:[%s7 + $0x658] sm:$0xff]
    %v741 = vld [vmem:[%s7 + $0x660] sm:$0xff]
    %v742 = vld [vmem:[%s7 + $0x668] sm:$0xff]
    %v743 = vld [vmem:[%s7 + $0x670] sm:$0xff]
    %v744 = vld [vmem:[%s7 + $0x678] sm:$0xff]
    %v745 = vld [vmem:[%s7 + $0x680] sm:$0xff]
    %v746 = vld [vmem:[%s7 + $0x688] sm:$0xff]
    %v747 = vld [vmem:[%s7 + $0x690] sm:$0xff]
    %v748 = vld [vmem:[%s7 + $0x698] sm:$0xff]
    %v749 = vld [vmem:[%s7 + $0x6a0] sm:$0xff]
    %v750 = vld [vmem:[%s7 + $0x6a8] sm:$0xff]
    %v751 = vld [vmem:[%s7 + $0x6b0] sm:$0xff]
    %v752 = vld [vmem:[%s7 + $0x6b8] sm:$0xff]
    %v753 = vld [vmem:[%s7 + $0x6c0] sm:$0xff]
    %v754 = vld [vmem:[%s7 + $0x6c8] sm:$0xff]
    %v755 = vld [vmem:[%s7 + $0x6d0] sm:$0xff]
    %v756 = vld [vmem:[%s7 + $0x6d8] sm:$0xff]
    %v757 = vld [vmem:[%s7 + $0x6e0] sm:$0xff]
    %v758 = vld [vmem:[%s7 + $0x6e8] sm:$0xff]
    %v759 = vld [vmem:[%s7 + $0x6f0] sm:$0xff]
    %v760 = vld [vmem:[%s7 + $0x6f8] sm:$0xff]
    %v761 = vld [vmem:[%s7 + $0x700] sm:$0xff]
    %v762 = vld [vmem:[%s7 + $0x708] sm:$0xff]
    %v763 = vld [vmem:[%s7 + $0x710] sm:$0xff]
    %v764 = vld [vmem:[%s7 + $0x718] sm:$0xff]
    %v765 = vld [vmem:[%s7 + $0x720] sm:$0xff]
    %v766 = vld [vmem:[%s7 + $0x728] sm:$0xff]
    %v767 = vld [vmem:[%s7 + $0x730] sm:$0xff]
    %v768 = vld [vmem:[%s7 + $0x738] sm:$0xff]
    %v769 = vld [vmem:[%s7 + $0x740] sm:$0xff]
    %v770 = vld [vmem:[%s7 + $0x748] sm:$0xff]
    %v771 = vld [vmem:[%s7 + $0x750] sm:$0xff]
    %v772 = vld [vmem:[%s7 + $0x758] sm:$0xff]
    %v773 = vld [vmem:[%s7 + $0x760] sm:$0xff]
    %v774 = vld [vmem:[%s7 + $0x768] sm:$0xff]
    %v775 = vld [vmem:[%s7 + $0x770] sm:$0xff]
    %v776 = vld [vmem:[%s7 + $0x778] sm:$0xff]
    %v777 = vld [vmem:[%s7 + $0x780] sm:$0xff]
    %v778 = vld [vmem:[%s7 + $0x788] sm:$0xff]
    %v779 = vld [vmem:[%s7 + $0x790] sm:$0xff]
    %v780 = vld [vmem:[%s7 + $0x798] sm:$0xff]
    %v781 = vld [vmem:[%s7 + $0x7a0] sm:$0xff]
    %v782 = vld [vmem:[%s7 + $0x7a8] sm:$0xff]
    %v783 = vld [vmem:[%s7 + $0x7b0] sm:$0xff]
    %v784 = vld [vmem:[%s7 + $0x7b8] sm:$0xff]
    %v785 = vld [vmem:[%s7 + $0x7c0] sm:$0xff]
    %v786 = vld [vmem:[%s7 + $0x7c8] sm:$0xff]
    %v787 = vld [vmem:[%s7 + $0x7d0] sm:$0xff]
    %v788 = vld [vmem:[%s7 + $0x7d8] sm:$0xff]
    %v789 = vld [vmem:[%s7 + $0x7e0] sm:$0xff]
    %v790 = vld [vmem:[%s7 + $0x7e8] sm:$0xff]
    %v791 = vld [vmem:[%s7 + $0x7f0] sm:$0xff]
    %v792 = vld [vmem:[%s7 + $0x7f8] sm:$0xff]
    %v793 = vld [vmem:[%s7 + $0x800] sm:$0xff]
    %v794 = vld [vmem:[%s7 + $0x808] sm:$0xff]
    %v795 = vld [vmem:[%s7 + $0x810] sm:$0xff]
    %v796 = vld [vmem:[%s7 + $0x818] sm:$0xff]
    %v797 = vld [vmem:[%s7 + $0x820] sm:$0xff]
    %v798 = vld [vmem:[%s7 + $0x828] sm:$0xff]
    %v799 = vld [vmem:[%s7 + $0x830] sm:$0xff]
    %v800 = vld [vmem:[%s7 + $0x838] sm:$0xff]
    %v801 = vld [vmem:[%s7 + $0x840] sm:$0xff]
    %v802 = vld [vmem:[%s7 + $0x848] sm:$0xff]
    %v803 = vld [vmem:[%s7 + $0x850] sm:$0xff]
    %v804 = vld [vmem:[%s7 + $0x858] sm:$0xff]
    %v805 = vld [vmem:[%s7 + $0x860] sm:$0xff]
    %v806 = vld [vmem:[%s7 + $0x868] sm:$0xff]
    %v807 = vld [vmem:[%s7 + $0x870] sm:$0xff]
    %v808 = vld [vmem:[%s7 + $0x878] sm:$0xff]
    %v809 = vld [vmem:[%s7 + $0x880] sm:$0xff]
    %v810 = vld [vmem:[%s7 + $0x888] sm:$0xff]
    %v811 = vld [vmem:[%s7 + $0x890] sm:$0xff]
    %v812 = vld [vmem:[%s7 + $0x898] sm:$0xff]
    %v813 = vld [vmem:[%s7 + $0x8a0] sm:$0xff]
    %v814 = vld [vmem:[%s7 + $0x8a8] sm:$0xff]
    %v815 = vld [vmem:[%s7 + $0x8b0] sm:$0xff]
    %v816 = vld [vmem:[%s7 + $0x8b8] sm:$0xff]
    %v817 = vld [vmem:[%s7 + $0x8c0] sm:$0xff]
    %v818 = vld [vmem:[%s7 + $0x8c8] sm:$0xff]
    %v819 = vld [vmem:[%s7 + $0x8d0] sm:$0xff]
    %v820 = vld [vmem:[%s7 + $0x8d8] sm:$0xff]
    %v821 = vld [vmem:[%s7 + $0x8e0] sm:$0xff]
    %v822 = vld [vmem:[%s7 + $0x8e8] sm:$0xff]
    %v823 = vld [vmem:[%s7 + $0x8f0] sm:$0xff]
    %v824 = vld [vmem:[%s7 + $0x8f8] sm:$0xff]
    %v825 = vld [vmem:[%s7 + $0x900] sm:$0xff]
    %v826 = vld [vmem:[%s7 + $0x908] sm:$0xff]
    %v827 = vld [vmem:[%s7 + $0x910] sm:$0xff]
    %v828 = vld [vmem:[%s7 + $0x918] sm:$0xff]
    %v829 = vld [vmem:[%s7 + $0x920] sm:$0xff]
    %v830 = vld [vmem:[%s7 + $0x928] sm:$0xff]
    %v831 = vld [vmem:[%s7 + $0x930] sm:$0xff]
    %v832 = vld [vmem:[%s7 + $0x938] sm:$0xff]
    %v833 = vld [vmem:[%s7 + $0x940] sm:$0xff]
    %v834 = vld [vmem:[%s7 + $0x948] sm:$0xff]
    %v835 = vld [vmem:[%s7 + $0x950] sm:$0xff]
    %v836 = vld [vmem:[%s7 + $0x958] sm:$0xff]
    %v837 = vld [vmem:[%s7 + $0x960] sm:$0xff]
    %v838 = vld [vmem:[%s7 + $0x968] sm:$0xff]
    %v839 = vld [vmem:[%s7 + $0x970] sm:$0xff]
    %v840 = vld [vmem:[%s7 + $0x978] sm:$0xff]
    %v841 = vld [vmem:[%s7 + $0x980] sm:$0xff]
    %v842 = vld [vmem:[%s7 + $0x988] sm:$0xff]
    %v843 = vld [vmem:[%s7 + $0x990] sm:$0xff]
    %v844 = vld [vmem:[%s7 + $0x998] sm:$0xff]
    %v845 = vld [vmem:[%s7 + $0x9a0] sm:$0xff]
    %v846 = vld [vmem:[%s7 + $0x9a8] sm:$0xff]
    %v847 = vld [vmem:[%s7 + $0x9b0] sm:$0xff]
    %v848 = vld [vmem:[%s7 + $0x9b8] sm:$0xff]
    %v849 = vld [vmem:[%s7 + $0x9c0] sm:$0xff]
    %v850 = vld [vmem:[%s7 + $0x9c8] sm:$0xff]
    %v851 = vld [vmem:[%s7 + $0x9d0] sm:$0xff]
    %v852 = vld [vmem:[%s7 + $0x9d8] sm:$0xff]
    %v853 = vld [vmem:[%s7 + $0x9e0] sm:$0xff]
    %v854 = vld [vmem:[%s7 + $0x9e8] sm:$0xff]
    %v855 = vld [vmem:[%s7 + $0x9f0] sm:$0xff]
    %v856 = vld [vmem:[%s7 + $0x9f8] sm:$0xff]
    %v857 = vld [vmem:[%s7 + $0xa00] sm:$0xff]
    %v858 = vld [vmem:[%s7 + $0xa08] sm:$0xff]
    %v859 = vld [vmem:[%s7 + $0xa10] sm:$0xff]
    %v860 = vld [vmem:[%s7 + $0xa18] sm:$0xff]
    %v861 = vld [vmem:[%s7 + $0xa20] sm:$0xff]
    %v862 = vld [vmem:[%s7 + $0xa28] sm:$0xff]
    %v863 = vld [vmem:[%s7 + $0xa30] sm:$0xff]
    %v864 = vld [vmem:[%s7 + $0xa38] sm:$0xff]
    %v865 = vld [vmem:[%s7 + $0xa40] sm:$0xff]
    %v866 = vld [vmem:[%s7 + $0xa48] sm:$0xff]
    %v867 = vld [vmem:[%s7 + $0xa50] sm:$0xff]
    %v868 = vld [vmem:[%s7 + $0xa58] sm:$0xff]
    %v869 = vld [vmem:[%s7 + $0xa60] sm:$0xff]
    %v870 = vld [vmem:[%s7 + $0xa68] sm:$0xff]
    %v871 = vld [vmem:[%s7 + $0xa70] sm:$0xff]
    %v872 = vld [vmem:[%s7 + $0xa78] sm:$0xff]
    %v873 = vld [vmem:[%s7 + $0xa80] sm:$0xff]
    %v874 = vld [vmem:[%s7 + $0xa88] sm:$0xff]
    %v875 = vld [vmem:[%s7 + $0xa90] sm:$0xff]
    %v876 = vld [vmem:[%s7 + $0xa98] sm:$0xff]
    %v877 = vld [vmem:[%s7 + $0xaa0] sm:$0xff]
    %v878 = vld [vmem:[%s7 + $0xaa8] sm:$0xff]
    %v879 = vld [vmem:[%s7 + $0xab0] sm:$0xff]
    %v880 = vld [vmem:[%s7 + $0xab8] sm:$0xff]
    %v881 = vld [vmem:[%s7 + $0xac0] sm:$0xff]
    %v882 = vld [vmem:[%s7 + $0xac8] sm:$0xff]
    %v883 = vld [vmem:[%s7 + $0xad0] sm:$0xff]
    %v884 = vld [vmem:[%s7 + $0xad8] sm:$0xff]
    %v885 = vld [vmem:[%s7 + $0xae0] sm:$0xff]
    %v886 = vld [vmem:[%s7 + $0xae8] sm:$0xff]
    %v887 = vld [vmem:[%s7 + $0xaf0] sm:$0xff]
    %v888 = vld [vmem:[%s7 + $0xaf8] sm:$0xff]
    %v889 = vld [vmem:[%s7 + $0xb00] sm:$0xff]
    %v890 = vld [vmem:[%s7 + $0xb08] sm:$0xff]
    %v891 = vld [vmem:[%s7 + $0xb10] sm:$0xff]
    %v892 = vld [vmem:[%s7 + $0xb18] sm:$0xff]
    %v893 = vld [vmem:[%s7 + $0xb20] sm:$0xff]
    %v894 = vld [vmem:[%s7 + $0xb28] sm:$0xff]
    %v895 = vld [vmem:[%s7 + $0xb30] sm:$0xff]
    %v896 = vld [vmem:[%s7 + $0xb38] sm:$0xff]
    %v897 = vld [vmem:[%s7 + $0xb40] sm:$0xff]
    %v898 = vld [vmem:[%s7 + $0xb48] sm:$0xff]
    %v899 = vld [vmem:[%s7 + $0xb50] sm:$0xff]
    %v900 = vld [vmem:[%s7 + $0xb58] sm:$0xff]
    %v901 = vld [vmem:[%s7 + $0xb60] sm:$0xff]
    %v902 = vld [vmem:[%s7 + $0xb68] sm:$0xff]
    %v903 = vld [vmem:[%s7 + $0xb70] sm:$0xff]
    %v904 = vld [vmem:[%s7 + $0xb78] sm:$0xff]
    %v905 = vld [vmem:[%s7 + $0xb80] sm:$0xff]
    %v906 = vld [vmem:[%s7 + $0xb88] sm:$0xff]
    %v907 = vld [vmem:[%s7 + $0xb90] sm:$0xff]
    %v908 = vld [vmem:[%s7 + $0xb98] sm:$0xff]
    %v909 = vld [vmem:[%s7 + $0xba0] sm:$0xff]
    %v910 = vld [vmem:[%s7 + $0xba8] sm:$0xff]
    %v911 = vld [vmem:[%s7 + $0xbb0] sm:$0xff]
    %v912 = vld [vmem:[%s7 + $0xbb8] sm:$0xff]
    %v913 = vld [vmem:[%s7 + $0xbc0] sm:$0xff]
    %v914 = vld [vmem:[%s7 + $0xbc8] sm:$0xff]
    %v915 = vld [vmem:[%s7 + $0xbd0] sm:$0xff]
    %v916 = vld [vmem:[%s7 + $0xbd8] sm:$0xff]
    %v917 = vld [vmem:[%s7 + $0xbe0] sm:$0xff]
    %v918 = vld [vmem:[%s7 + $0xbe8] sm:$0xff]
    %v919 = vld [vmem:[%s7 + $0xbf0] sm:$0xff]
    %v920 = vld [vmem:[%s7 + $0xbf8] sm:$0xff]
    %v921 = vld [vmem:[%s7 + $0xc00] sm:$0xff]
    %v922 = vld [vmem:[%s7 + $0xc08] sm:$0xff]
    %v923 = vld [vmem:[%s7 + $0xc10] sm:$0xff]
    %v924 = vld [vmem:[%s7 + $0xc18] sm:$0xff]
    %v925 = vld [vmem:[%s7 + $0xc20] sm:$0xff]
    %v926 = vld [vmem:[%s7 + $0xc28] sm:$0xff]
    %v927 = vld [vmem:[%s7 + $0xc30] sm:$0xff]
    %v928 = vld [vmem:[%s7 + $0xc38] sm:$0xff]
    %v929 = vld [vmem:[%s7 + $0xc40] sm:$0xff]
    %v930 = vld [vmem:[%s7 + $0xc48] sm:$0xff]
    %v931 = vld [vmem:[%s7 + $0xc50] sm:$0xff]
    %v932 = vld [vmem:[%s7 + $0xc58] sm:$0xff]
    %v933 = vld [vmem:[%s7 + $0xc60] sm:$0xff]
    %v934 = vld [vmem:[%s7 + $0xc68] sm:$0xff]
    %v935 = vld [vmem:[%s7 + $0xc70] sm:$0xff]
    %v936 = vld [vmem:[%s7 + $0xc78] sm:$0xff]
    %v937 = vld [vmem:[%s7 + $0xc80] sm:$0xff]
    %v938 = vld [vmem:[%s7 + $0xc88] sm:$0xff]
    %v939 = vld [vmem:[%s7 + $0xc90] sm:$0xff]
    %v940 = vld [vmem:[%s7 + $0xc98] sm:$0xff]
    %v941 = vld [vmem:[%s7 + $0xca0] sm:$0xff]
    %v942 = vld [vmem:[%s7 + $0xca8] sm:$0xff]
    %v943 = vld [vmem:[%s7 + $0xcb0] sm:$0xff]
    %v944 = vld [vmem:[%s7 + $0xcb8] sm:$0xff]
    %v945 = vld [vmem:[%s7 + $0xcc0] sm:$0xff]
    %v946 = vld [vmem:[%s7 + $0xcc8] sm:$0xff]
    %v947 = vld [vmem:[%s7 + $0xcd0] sm:$0xff]
    %v948 = vld [vmem:[%s7 + $0xcd8] sm:$0xff]
    %v949 = vld [vmem:[%s7 + $0xce0] sm:$0xff]
    %v950 = vld [vmem:[%s7 + $0xce8] sm:$0xff]
    %v951 = vld [vmem:[%s7 + $0xcf0] sm:$0xff]
    %v952 = vld [vmem:[%s7 + $0xcf8] sm:$0xff]
    %v953 = vld [vmem:[%s7 + $0xd00] sm:$0xff]
    %v954 = vld [vmem:[%s7 + $0xd08] sm:$0xff]
    %v955 = vld [vmem:[%s7 + $0xd10] sm:$0xff]
    %v956 = vld [vmem:[%s7 + $0xd18] sm:$0xff]
    %v957 = vld [vmem:[%s7 + $0xd20] sm:$0xff]
    %v958 = vld [vmem:[%s7 + $0xd28] sm:$0xff]
    %v959 = vld [vmem:[%s7 + $0xd30] sm:$0xff]
    %v960 = vld [vmem:[%s7 + $0xd38] sm:$0xff]
    %v961 = vld [vmem:[%s7 + $0xd40] sm:$0xff]
    %v962 = vld [vmem:[%s7 + $0xd48] sm:$0xff]
    %v963 = vld [vmem:[%s7 + $0xd50] sm:$0xff]
    %v964 = vld [vmem:[%s7 + $0xd58] sm:$0xff]
    %v965 = vld [vmem:[%s7 + $0xd60] sm:$0xff]
    %v966 = vld [vmem:[%s7 + $0xd68] sm:$0xff]
    %v967 = vld [vmem:[%s7 + $0xd70] sm:$0xff]
    %v968 = vld [vmem:[%s7 + $0xd78] sm:$0xff]
    %v969 = vld [vmem:[%s7 + $0xd80] sm:$0xff]
    %v970 = vld [vmem:[%s7 + $0xd88] sm:$0xff]
    %v971 = vld [vmem:[%s7 + $0xd90] sm:$0xff]
    %v972 = vld [vmem:[%s7 + $0xd98] sm:$0xff]
    %v973 = vld [vmem:[%s7 + $0xda0] sm:$0xff]
    %v974 = vld [vmem:[%s7 + $0xda8] sm:$0xff]
    %v975 = vld [vmem:[%s7 + $0xdb0] sm:$0xff]
    %v976 = vld [vmem:[%s7 + $0xdb8] sm:$0xff]
    %v977 = vld [vmem:[%s7 + $0xdc0] sm:$0xff]
    %v978 = vld [vmem:[%s7 + $0xdc8] sm:$0xff]
    %v979 = vld [vmem:[%s7 + $0xdd0] sm:$0xff]
    %v980 = vld [vmem:[%s7 + $0xdd8] sm:$0xff]
    %v981 = vld [vmem:[%s7 + $0xde0] sm:$0xff]
    %v982 = vld [vmem:[%s7 + $0xde8] sm:$0xff]
    %v983 = vld [vmem:[%s7 + $0xdf0] sm:$0xff]
    %v984 = vld [vmem:[%s7 + $0xdf8] sm:$0xff]
    %v985 = vld [vmem:[%s8] sm:$0x7f]
    %v987 = vlaneseq
    %v988 = vshrl.u32 %v987, 7
    %v989 = vsub.s32 0, %v988
    %v990 = vrot.slane %v985, %v989
    %v991 = vlaneseq
    %v992 = vshrl.u32 %v991, 7
    %v993 = vsub.s32 1, %v992
    %v994 = vrot.slane %v985, %v993
    %v995 = vlaneseq
    %v996 = vshrl.u32 %v995, 7
    %v997 = vsub.s32 2, %v996
    %v998 = vrot.slane %v985, %v997
    %v999 = vlaneseq
    %v1000 = vshrl.u32 %v999, 7
    %v1001 = vsub.s32 3, %v1000
    %v1002 = vrot.slane %v985, %v1001
    %v1003 = vlaneseq
    %v1004 = vshrl.u32 %v1003, 7
    %v1005 = vsub.s32 4, %v1004
    %v1006 = vrot.slane %v985, %v1005
    %v1007 = vlaneseq
    %v1008 = vshrl.u32 %v1007, 7
    %v1009 = vsub.s32 5, %v1008
    %v1010 = vrot.slane %v985, %v1009
    %v1011 = vlaneseq
    %v1012 = vshrl.u32 %v1011, 7
    %v1013 = vsub.s32 6, %v1012
    %v1014 = vrot.slane %v985, %v1013
    %1022 = vmatprep.subr.mxu0 %v643
    %1023 = vmatpush1.msra.mxu0 %v642
    %1024 = vmatprep.subr.mxu0 %v636
    %1025 = vmatpush1.msra.mxu0 %v635
    %1026 = vmatprep.subr.mxu0 %v629
    %1027 = vmatpush1.msra.mxu0 %v628
    %1028 = vmatprep.subr.mxu0 %v622
    %1029 = vmatpush1.msra.mxu0 %v621
    %1030 = vmatprep.subr.mxu0 %v615
    %1031 = vmatpush1.msra.mxu0 %v614
    %1032 = vmatprep.subr.mxu0 %v608
    %1033 = vmatpush1.msra.mxu0 %v607
    %1034 = vmatprep.subr.mxu0 %v601
    %1035 = vmatpush1.msra.mxu0 %v600
    %1036 = vmatprep.subr.mxu0 %v594
    %1037 = vmatpush1.msra.mxu0 %v593
    %1038 = vmatprep.subr.mxu0 %v587
    %1039 = vmatpush1.msra.mxu0 %v586
    %1040 = vmatprep.subr.mxu0 %v580
    %1041 = vmatpush1.msra.mxu0 %v579
    %1042 = vmatprep.subr.mxu0 %v573
    %1043 = vmatpush1.msra.mxu0 %v572
    %1044 = vmatprep.subr.mxu0 %v566
    %1045 = vmatpush1.msra.mxu0 %v565
    %1046 = vmatprep.subr.mxu0 %v559
    %1047 = vmatpush1.msra.mxu0 %v558
    %1048 = vmatprep.subr.mxu0 %v552
    %1049 = vmatpush1.msra.mxu0 %v551
    %1050 = vmatprep.subr.mxu0 %v545
    %1051 = vmatpush1.msra.mxu0 %v544
    %1052 = vmatprep.subr.mxu0 %v538
    %1053 = vmatpush1.msra.mxu0 %v537
    %1054 = vmatprep.subr.mxu0 %v755
    %1055 = vmatpush2.msra.mxu0 %v754
    %1056 = vmatprep.subr.mxu0 %v748
    %1057 = vmatpush2.msra.mxu0 %v747
    %1058 = vmatprep.subr.mxu0 %v741
    %1059 = vmatpush2.msra.mxu0 %v740
    %1060 = vmatprep.subr.mxu0 %v734
    %1061 = vmatpush2.msra.mxu0 %v733
    %1062 = vmatprep.subr.mxu0 %v727
    %1063 = vmatpush2.msra.mxu0 %v726
    %1064 = vmatprep.subr.mxu0 %v720
    %1065 = vmatpush2.msra.mxu0 %v719
    %1066 = vmatprep.subr.mxu0 %v713
    %1067 = vmatpush2.msra.mxu0 %v712
    %1068 = vmatprep.subr.mxu0 %v706
    %1069 = vmatpush2.msra.mxu0 %v705
    %1070 = vmatprep.subr.mxu0 %v699
    %1071 = vmatpush2.msra.mxu0 %v698
    %1072 = vmatprep.subr.mxu0 %v692
    %1073 = vmatpush2.msra.mxu0 %v691
    %1074 = vmatprep.subr.mxu0 %v685
    %1075 = vmatpush2.msra.mxu0 %v684
    %1076 = vmatprep.subr.mxu0 %v678
    %1077 = vmatpush2.msra.mxu0 %v677
    %1078 = vmatprep.subr.mxu0 %v671
    %1079 = vmatpush2.msra.mxu0 %v670
    %1080 = vmatprep.subr.mxu0 %v664
    %1081 = vmatpush2.msra.mxu0 %v663
    %1082 = vmatprep.subr.mxu0 %v657
    %1083 = vmatpush2.msra.mxu0 %v656
    %1084 = vmatprep.subr.mxu0 %v650
    %1085 = vmatpush2.msra.mxu0 %v649
    %1086 = vmatprep.mubr.f32.mxu0 %v534
    %1087 = vmatmul.mubr.f32.gmra.mxu0 %v533
    %v1088 = vpop.f32.mrf.mxu0
    %v1089 = vadd.f32 %v990, %v1088
    %v1090 = vpop.f32.mrf.mxu0
    %v1091 = vadd.f32 %v994, %v1090
    %1092 = vdwg.mxu0
    %1093 = vmatprep.subr.mxu0 %v867
    %1094 = vmatpush1.msra.mxu0 %v866
    %1095 = vmatprep.subr.mxu0 %v860
    %1096 = vmatpush1.msra.mxu0 %v859
    %1097 = vmatprep.subr.mxu0 %v853
    %1098 = vmatpush1.msra.mxu0 %v852
    %1099 = vmatprep.subr.mxu0 %v846
    %1100 = vmatpush1.msra.mxu0 %v845
    %1101 = vmatprep.subr.mxu0 %v839
    %1102 = vmatpush1.msra.mxu0 %v838
    %1103 = vmatprep.subr.mxu0 %v832
    %1104 = vmatpush1.msra.mxu0 %v831
    %1105 = vmatprep.subr.mxu0 %v825
    %1106 = vmatpush1.msra.mxu0 %v824
    %1107 = vmatprep.subr.mxu0 %v818
    %1108 = vmatpush1.msra.mxu0 %v817
    %1109 = vmatprep.subr.mxu0 %v811
    %1110 = vmatpush1.msra.mxu0 %v810
    %1111 = vmatprep.subr.mxu0 %v804
    %1112 = vmatpush1.msra.mxu0 %v803
    %1113 = vmatprep.subr.mxu0 %v797
    %1114 = vmatpush1.msra.mxu0 %v796
    %1115 = vmatprep.subr.mxu0 %v790
    %1116 = vmatpush1.msra.mxu0 %v789
    %1117 = vmatprep.subr.mxu0 %v783
    %1118 = vmatpush1.msra.mxu0 %v782
    %1119 = vmatprep.subr.mxu0 %v776
    %1120 = vmatpush1.msra.mxu0 %v775
    %1121 = vmatprep.subr.mxu0 %v769
    %1122 = vmatpush1.msra.mxu0 %v768
    %1123 = vmatprep.subr.mxu0 %v762
    %1124 = vmatpush1.msra.mxu0 %v761
    %1125 = vmatprep.subr.mxu0 %v979
    %1126 = vmatpush2.msra.mxu0 %v978
    %1127 = vmatprep.subr.mxu0 %v972
    %1128 = vmatpush2.msra.mxu0 %v971
    %1129 = vmatprep.subr.mxu0 %v965
    %1130 = vmatpush2.msra.mxu0 %v964
    %1131 = vmatprep.subr.mxu0 %v958
    %1132 = vmatpush2.msra.mxu0 %v957
    %1133 = vmatprep.subr.mxu0 %v951
    %1134 = vmatpush2.msra.mxu0 %v950
    %1135 = vmatprep.subr.mxu0 %v944
    %1136 = vmatpush2.msra.mxu0 %v943
    %1137 = vmatprep.subr.mxu0 %v937
    %1138 = vmatpush2.msra.mxu0 %v936
    %1139 = vmatprep.subr.mxu0 %v930
    %1140 = vmatpush2.msra.mxu0 %v929
    %1141 = vmatprep.subr.mxu0 %v923
    %1142 = vmatpush2.msra.mxu0 %v922
    %1143 = vmatprep.subr.mxu0 %v916
    %1144 = vmatpush2.msra.mxu0 %v915
    %1145 = vmatprep.subr.mxu0 %v909
    %1146 = vmatpush2.msra.mxu0 %v908
    %1147 = vmatprep.subr.mxu0 %v902
    %1148 = vmatpush2.msra.mxu0 %v901
    %1149 = vmatprep.subr.mxu0 %v895
    %1150 = vmatpush2.msra.mxu0 %v894
    %1151 = vmatprep.subr.mxu0 %v888
    %1152 = vmatpush2.msra.mxu0 %v887
    %1153 = vmatprep.subr.mxu0 %v881
    %1154 = vmatpush2.msra.mxu0 %v880
    %1155 = vmatprep.subr.mxu0 %v874
    %1156 = vmatpush2.msra.mxu0 %v873
    %1157 = vmatprep.mubr.f32.mxu0 %v536
    %1158 = vmatmul.mubr.f32.gmra.mxu0 %v535
    %v1159 = vpop.f32.mrf.mxu0
    %v1160 = vadd.f32 %v1089, %v1159
    %v1161 = vpop.f32.mrf.mxu0
    %v1162 = vadd.f32 %v1091, %v1161
    %1163 = vdwg.mxu0
    %1164 = vmatprep.subr.mxu0 %v645
    %1165 = vmatpush1.msra.mxu0 %v644
    %1166 = vmatprep.subr.mxu0 %v638
    %1167 = vmatpush1.msra.mxu0 %v637
    %1168 = vmatprep.subr.mxu0 %v631
    %1169 = vmatpush1.msra.mxu0 %v630
    %1170 = vmatprep.subr.mxu0 %v624
    %1171 = vmatpush1.msra.mxu0 %v623
    %1172 = vmatprep.subr.mxu0 %v617
    %1173 = vmatpush1.msra.mxu0 %v616
    %1174 = vmatprep.subr.mxu0 %v610
    %1175 = vmatpush1.msra.mxu0 %v609
    %1176 = vmatprep.subr.mxu0 %v603
    %1177 = vmatpush1.msra.mxu0 %v602
    %1178 = vmatprep.subr.mxu0 %v596
    %1179 = vmatpush1.msra.mxu0 %v595
    %1180 = vmatprep.subr.mxu0 %v589
    %1181 = vmatpush1.msra.mxu0 %v588
    %1182 = vmatprep.subr.mxu0 %v582
    %1183 = vmatpush1.msra.mxu0 %v581
    %1184 = vmatprep.subr.mxu0 %v575
    %1185 = vmatpush1.msra.mxu0 %v574
    %1186 = vmatprep.subr.mxu0 %v568
    %1187 = vmatpush1.msra.mxu0 %v567
    %1188 = vmatprep.subr.mxu0 %v561
    %1189 = vmatpush1.msra.mxu0 %v560
    %1190 = vmatprep.subr.mxu0 %v554
    %1191 = vmatpush1.msra.mxu0 %v553
    %1192 = vmatprep.subr.mxu0 %v547
    %1193 = vmatpush1.msra.mxu0 %v546
    %1194 = vmatprep.subr.mxu0 %v540
    %1195 = vmatpush1.msra.mxu0 %v539
    %1196 = vmatprep.subr.mxu0 %v757
    %1197 = vmatpush2.msra.mxu0 %v756
    %1198 = vmatprep.subr.mxu0 %v750
    %1199 = vmatpush2.msra.mxu0 %v749
    %1200 = vmatprep.subr.mxu0 %v743
    %1201 = vmatpush2.msra.mxu0 %v742
    %1202 = vmatprep.subr.mxu0 %v736
    %1203 = vmatpush2.msra.mxu0 %v735
    %1204 = vmatprep.subr.mxu0 %v729
    %1205 = vmatpush2.msra.mxu0 %v728
    %1206 = vmatprep.subr.mxu0 %v722
    %1207 = vmatpush2.msra.mxu0 %v721
    %1208 = vmatprep.subr.mxu0 %v715
    %1209 = vmatpush2.msra.mxu0 %v714
    %1210 = vmatprep.subr.mxu0 %v708
    %1211 = vmatpush2.msra.mxu0 %v707
    %1212 = vmatprep.subr.mxu0 %v701
    %1213 = vmatpush2.msra.mxu0 %v700
    %1214 = vmatprep.subr.mxu0 %v694
    %1215 = vmatpush2.msra.mxu0 %v693
    %1216 = vmatprep.subr.mxu0 %v687
    %1217 = vmatpush2.msra.mxu0 %v686
    %1218 = vmatprep.subr.mxu0 %v680
    %1219 = vmatpush2.msra.mxu0 %v679
    %1220 = vmatprep.subr.mxu0 %v673
    %1221 = vmatpush2.msra.mxu0 %v672
    %1222 = vmatprep.subr.mxu0 %v666
    %1223 = vmatpush2.msra.mxu0 %v665
    %1224 = vmatprep.subr.mxu0 %v659
    %1225 = vmatpush2.msra.mxu0 %v658
    %1226 = vmatprep.subr.mxu0 %v652
    %1227 = vmatpush2.msra.mxu0 %v651
    %1228 = vmatprep.mubr.f32.mxu0 %v534
    %1229 = vmatmul.mubr.f32.gmra.mxu0 %v533
    %v1230 = vpop.f32.mrf.mxu0
    %v1231 = vadd.f32 %v998, %v1230
    %v1232 = vpop.f32.mrf.mxu0
    %v1233 = vadd.f32 %v1002, %v1232
    %1234 = vdwg.mxu0
    %1235 = vmatprep.subr.mxu0 %v869
    %1236 = vmatpush1.msra.mxu0 %v868
    %1237 = vmatprep.subr.mxu0 %v862
    %1238 = vmatpush1.msra.mxu0 %v861
    %1239 = vmatprep.subr.mxu0 %v855
    %1240 = vmatpush1.msra.mxu0 %v854
    %1241 = vmatprep.subr.mxu0 %v848
    %1242 = vmatpush1.msra.mxu0 %v847
    %1243 = vmatprep.subr.mxu0 %v841
    %1244 = vmatpush1.msra.mxu0 %v840
    %1245 = vmatprep.subr.mxu0 %v834
    %1246 = vmatpush1.msra.mxu0 %v833
    %1247 = vmatprep.subr.mxu0 %v827
    %1248 = vmatpush1.msra.mxu0 %v826
    %1249 = vmatprep.subr.mxu0 %v820
    %1250 = vmatpush1.msra.mxu0 %v819
    %1251 = vmatprep.subr.mxu0 %v813
    %1252 = vmatpush1.msra.mxu0 %v812
    %1253 = vmatprep.subr.mxu0 %v806
    %1254 = vmatpush1.msra.mxu0 %v805
    %1255 = vmatprep.subr.mxu0 %v799
    %1256 = vmatpush1.msra.mxu0 %v798
    %1257 = vmatprep.subr.mxu0 %v792
    %1258 = vmatpush1.msra.mxu0 %v791
    %1259 = vmatprep.subr.mxu0 %v785
    %1260 = vmatpush1.msra.mxu0 %v784
    %1261 = vmatprep.subr.mxu0 %v778
    %1262 = vmatpush1.msra.mxu0 %v777
    %1263 = vmatprep.subr.mxu0 %v771
    %1264 = vmatpush1.msra.mxu0 %v770
    %1265 = vmatprep.subr.mxu0 %v764
    %1266 = vmatpush1.msra.mxu0 %v763
    %1267 = vmatprep.subr.mxu0 %v981
    %1268 = vmatpush2.msra.mxu0 %v980
    %1269 = vmatprep.subr.mxu0 %v974
    %1270 = vmatpush2.msra.mxu0 %v973
    %1271 = vmatprep.subr.mxu0 %v967
    %1272 = vmatpush2.msra.mxu0 %v966
    %1273 = vmatprep.subr.mxu0 %v960
    %1274 = vmatpush2.msra.mxu0 %v959
    %1275 = vmatprep.subr.mxu0 %v953
    %1276 = vmatpush2.msra.mxu0 %v952
    %1277 = vmatprep.subr.mxu0 %v946
    %1278 = vmatpush2.msra.mxu0 %v945
    %1279 = vmatprep.subr.mxu0 %v939
    %1280 = vmatpush2.msra.mxu0 %v938
    %1281 = vmatprep.subr.mxu0 %v932
    %1282 = vmatpush2.msra.mxu0 %v931
    %1283 = vmatprep.subr.mxu0 %v925
    %1284 = vmatpush2.msra.mxu0 %v924
    %1285 = vmatprep.subr.mxu0 %v918
    %1286 = vmatpush2.msra.mxu0 %v917
    %1287 = vmatprep.subr.mxu0 %v911
    %1288 = vmatpush2.msra.mxu0 %v910
    %1289 = vmatprep.subr.mxu0 %v904
    %1290 = vmatpush2.msra.mxu0 %v903
    %1291 = vmatprep.subr.mxu0 %v897
    %1292 = vmatpush2.msra.mxu0 %v896
    %1293 = vmatprep.subr.mxu0 %v890
    %1294 = vmatpush2.msra.mxu0 %v889
    %1295 = vmatprep.subr.mxu0 %v883
    %1296 = vmatpush2.msra.mxu0 %v882
    %1297 = vmatprep.subr.mxu0 %v876
    %1298 = vmatpush2.msra.mxu0 %v875
    %1299 = vmatprep.mubr.f32.mxu0 %v536
    %1300 = vmatmul.mubr.f32.gmra.mxu0 %v535
    %v1301 = vpop.f32.mrf.mxu0
    %v1302 = vadd.f32 %v1231, %v1301
    %v1303 = vpop.f32.mrf.mxu0
    %v1304 = vadd.f32 %v1233, %v1303
    %1305 = vdwg.mxu0
    %1306 = vmatprep.subr.mxu0 %v647
    %1307 = vmatpush1.msra.mxu0 %v646
    %1308 = vmatprep.subr.mxu0 %v640
    %1309 = vmatpush1.msra.mxu0 %v639
    %1310 = vmatprep.subr.mxu0 %v633
    %1311 = vmatpush1.msra.mxu0 %v632
    %1312 = vmatprep.subr.mxu0 %v626
    %1313 = vmatpush1.msra.mxu0 %v625
    %1314 = vmatprep.subr.mxu0 %v619
    %1315 = vmatpush1.msra.mxu0 %v618
    %1316 = vmatprep.subr.mxu0 %v612
    %1317 = vmatpush1.msra.mxu0 %v611
    %1318 = vmatprep.subr.mxu0 %v605
    %1319 = vmatpush1.msra.mxu0 %v604
    %1320 = vmatprep.subr.mxu0 %v598
    %1321 = vmatpush1.msra.mxu0 %v597
    %1322 = vmatprep.subr.mxu0 %v591
    %1323 = vmatpush1.msra.mxu0 %v590
    %1324 = vmatprep.subr.mxu0 %v584
    %1325 = vmatpush1.msra.mxu0 %v583
    %1326 = vmatprep.subr.mxu0 %v577
    %1327 = vmatpush1.msra.mxu0 %v576
    %1328 = vmatprep.subr.mxu0 %v570
    %1329 = vmatpush1.msra.mxu0 %v569
    %1330 = vmatprep.subr.mxu0 %v563
    %1331 = vmatpush1.msra.mxu0 %v562
    %1332 = vmatprep.subr.mxu0 %v556
    %1333 = vmatpush1.msra.mxu0 %v555
    %1334 = vmatprep.subr.mxu0 %v549
    %1335 = vmatpush1.msra.mxu0 %v548
    %1336 = vmatprep.subr.mxu0 %v542
    %1337 = vmatpush1.msra.mxu0 %v541
    %1338 = vmatprep.subr.mxu0 %v759
    %1339 = vmatpush2.msra.mxu0 %v758
    %1340 = vmatprep.subr.mxu0 %v752
    %1341 = vmatpush2.msra.mxu0 %v751
    %1342 = vmatprep.subr.mxu0 %v745
    %1343 = vmatpush2.msra.mxu0 %v744
    %1344 = vmatprep.subr.mxu0 %v738
    %1345 = vmatpush2.msra.mxu0 %v737
    %1346 = vmatprep.subr.mxu0 %v731
    %1347 = vmatpush2.msra.mxu0 %v730
    %1348 = vmatprep.subr.mxu0 %v724
    %1349 = vmatpush2.msra.mxu0 %v723
    %1350 = vmatprep.subr.mxu0 %v717
    %1351 = vmatpush2.msra.mxu0 %v716
    %1352 = vmatprep.subr.mxu0 %v710
    %1353 = vmatpush2.msra.mxu0 %v709
    %1354 = vmatprep.subr.mxu0 %v703
    %1355 = vmatpush2.msra.mxu0 %v702
    %1356 = vmatprep.subr.mxu0 %v696
    %1357 = vmatpush2.msra.mxu0 %v695
    %1358 = vmatprep.subr.mxu0 %v689
    %1359 = vmatpush2.msra.mxu0 %v688
    %1360 = vmatprep.subr.mxu0 %v682
    %1361 = vmatpush2.msra.mxu0 %v681
    %1362 = vmatprep.subr.mxu0 %v675
    %1363 = vmatpush2.msra.mxu0 %v674
    %1364 = vmatprep.subr.mxu0 %v668
    %1365 = vmatpush2.msra.mxu0 %v667
    %1366 = vmatprep.subr.mxu0 %v661
    %1367 = vmatpush2.msra.mxu0 %v660
    %1368 = vmatprep.subr.mxu0 %v654
    %1369 = vmatpush2.msra.mxu0 %v653
    %1370 = vmatprep.mubr.f32.mxu0 %v534
    %1371 = vmatmul.mubr.f32.gmra.mxu0 %v533
    %v1372 = vpop.f32.mrf.mxu0
    %v1373 = vadd.f32 %v1006, %v1372
    %v1374 = vpop.f32.mrf.mxu0
    %v1375 = vadd.f32 %v1010, %v1374
    %1376 = vdwg.mxu0
    %1377 = vmatprep.subr.mxu0 %v871
    %1378 = vmatpush1.msra.mxu0 %v870
    %1379 = vmatprep.subr.mxu0 %v864
    %1380 = vmatpush1.msra.mxu0 %v863
    %1381 = vmatprep.subr.mxu0 %v857
    %1382 = vmatpush1.msra.mxu0 %v856
    %1383 = vmatprep.subr.mxu0 %v850
    %1384 = vmatpush1.msra.mxu0 %v849
    %1385 = vmatprep.subr.mxu0 %v843
    %1386 = vmatpush1.msra.mxu0 %v842
    %1387 = vmatprep.subr.mxu0 %v836
    %1388 = vmatpush1.msra.mxu0 %v835
    %1389 = vmatprep.subr.mxu0 %v829
    %1390 = vmatpush1.msra.mxu0 %v828
    %1391 = vmatprep.subr.mxu0 %v822
    %1392 = vmatpush1.msra.mxu0 %v821
    %1393 = vmatprep.subr.mxu0 %v815
    %1394 = vmatpush1.msra.mxu0 %v814
    %1395 = vmatprep.subr.mxu0 %v808
    %1396 = vmatpush1.msra.mxu0 %v807
    %1397 = vmatprep.subr.mxu0 %v801
    %1398 = vmatpush1.msra.mxu0 %v800
    %1399 = vmatprep.subr.mxu0 %v794
    %1400 = vmatpush1.msra.mxu0 %v793
    %1401 = vmatprep.subr.mxu0 %v787
    %1402 = vmatpush1.msra.mxu0 %v786
    %1403 = vmatprep.subr.mxu0 %v780
    %1404 = vmatpush1.msra.mxu0 %v779
    %1405 = vmatprep.subr.mxu0 %v773
    %1406 = vmatpush1.msra.mxu0 %v772
    %1407 = vmatprep.subr.mxu0 %v766
    %1408 = vmatpush1.msra.mxu0 %v765
    %1409 = vmatprep.subr.mxu0 %v983
    %1410 = vmatpush2.msra.mxu0 %v982
    %1411 = vmatprep.subr.mxu0 %v976
    %1412 = vmatpush2.msra.mxu0 %v975
    %1413 = vmatprep.subr.mxu0 %v969
    %1414 = vmatpush2.msra.mxu0 %v968
    %1415 = vmatprep.subr.mxu0 %v962
    %1416 = vmatpush2.msra.mxu0 %v961
    %1417 = vmatprep.subr.mxu0 %v955
    %1418 = vmatpush2.msra.mxu0 %v954
    %1419 = vmatprep.subr.mxu0 %v948
    %1420 = vmatpush2.msra.mxu0 %v947
    %1421 = vmatprep.subr.mxu0 %v941
    %1422 = vmatpush2.msra.mxu0 %v940
    %1423 = vmatprep.subr.mxu0 %v934
    %1424 = vmatpush2.msra.mxu0 %v933
    %1425 = vmatprep.subr.mxu0 %v927
    %1426 = vmatpush2.msra.mxu0 %v926
    %1427 = vmatprep.subr.mxu0 %v920
    %1428 = vmatpush2.msra.mxu0 %v919
    %1429 = vmatprep.subr.mxu0 %v913
    %1430 = vmatpush2.msra.mxu0 %v912
    %1431 = vmatprep.subr.mxu0 %v906
    %1432 = vmatpush2.msra.mxu0 %v905
    %1433 = vmatprep.subr.mxu0 %v899
    %1434 = vmatpush2.msra.mxu0 %v898
    %1435 = vmatprep.subr.mxu0 %v892
    %1436 = vmatpush2.msra.mxu0 %v891
    %1437 = vmatprep.subr.mxu0 %v885
    %1438 = vmatpush2.msra.mxu0 %v884
    %1439 = vmatprep.subr.mxu0 %v878
    %1440 = vmatpush2.msra.mxu0 %v877
    %1441 = vmatprep.mubr.f32.mxu0 %v536
    %1442 = vmatmul.mubr.f32.gmra.mxu0 %v535
    %v1443 = vpop.f32.mrf.mxu0
    %v1444 = vadd.f32 %v1373, %v1443
    %v1445 = vpop.f32.mrf.mxu0
    %v1446 = vadd.f32 %v1375, %v1445
    %1447 = vdwg.mxu0
    %1448 = vmatprep.subr.mxu0 0.0
    %1449 = vmatpush1.msra.mxu0 %v648
    %1450 = vmatprep.subr.mxu0 0.0
    %1451 = vmatpush1.msra.mxu0 %v641
    %1452 = vmatprep.subr.mxu0 0.0
    %1453 = vmatpush1.msra.mxu0 %v634
    %1454 = vmatprep.subr.mxu0 0.0
    %1455 = vmatpush1.msra.mxu0 %v627
    %1456 = vmatprep.subr.mxu0 0.0
    %1457 = vmatpush1.msra.mxu0 %v620
    %1458 = vmatprep.subr.mxu0 0.0
    %1459 = vmatpush1.msra.mxu0 %v613
    %1460 = vmatprep.subr.mxu0 0.0
    %1461 = vmatpush1.msra.mxu0 %v606
    %1462 = vmatprep.subr.mxu0 0.0
    %1463 = vmatpush1.msra.mxu0 %v599
    %1464 = vmatprep.subr.mxu0 0.0
    %1465 = vmatpush1.msra.mxu0 %v592
    %1466 = vmatprep.subr.mxu0 0.0
    %1467 = vmatpush1.msra.mxu0 %v585
    %1468 = vmatprep.subr.mxu0 0.0
    %1469 = vmatpush1.msra.mxu0 %v578
    %1470 = vmatprep.subr.mxu0 0.0
    %1471 = vmatpush1.msra.mxu0 %v571
    %1472 = vmatprep.subr.mxu0 0.0
    %1473 = vmatpush1.msra.mxu0 %v564
    %1474 = vmatprep.subr.mxu0 0.0
    %1475 = vmatpush1.msra.mxu0 %v557
    %1476 = vmatprep.subr.mxu0 0.0
    %1477 = vmatpush1.msra.mxu0 %v550
    %1478 = vmatprep.subr.mxu0 0.0
    %1479 = vmatpush1.msra.mxu0 %v543
    %1480 = vmatprep.subr.mxu0 0.0
    %1481 = vmatpush2.msra.mxu0 %v760
    %1482 = vmatprep.subr.mxu0 0.0
    %1483 = vmatpush2.msra.mxu0 %v753
    %1484 = vmatprep.subr.mxu0 0.0
    %1485 = vmatpush2.msra.mxu0 %v746
    %1486 = vmatprep.subr.mxu0 0.0
    %1487 = vmatpush2.msra.mxu0 %v739
    %1488 = vmatprep.subr.mxu0 0.0
    %1489 = vmatpush2.msra.mxu0 %v732
    %1490 = vmatprep.subr.mxu0 0.0
    %1491 = vmatpush2.msra.mxu0 %v725
    %1492 = vmatprep.subr.mxu0 0.0
    %1493 = vmatpush2.msra.mxu0 %v718
    %1494 = vmatprep.subr.mxu0 0.0
    %1495 = vmatpush2.msra.mxu0 %v711
    %1496 = vmatprep.subr.mxu0 0.0
    %1497 = vmatpush2.msra.mxu0 %v704
    %1498 = vmatprep.subr.mxu0 0.0
    %1499 = vmatpush2.msra.mxu0 %v697
    %1500 = vmatprep.subr.mxu0 0.0
    %1501 = vmatpush2.msra.mxu0 %v690
    %1502 = vmatprep.subr.mxu0 0.0
    %1503 = vmatpush2.msra.mxu0 %v683
    %1504 = vmatprep.subr.mxu0 0.0
    %1505 = vmatpush2.msra.mxu0 %v676
    %1506 = vmatprep.subr.mxu0 0.0
    %1507 = vmatpush2.msra.mxu0 %v669
    %1508 = vmatprep.subr.mxu0 0.0
    %1509 = vmatpush2.msra.mxu0 %v662
    %1510 = vmatprep.subr.mxu0 0.0
    %1511 = vmatpush2.msra.mxu0 %v655
    %1512 = vmatprep.mubr.f32.mxu0 %v534
    %1513 = vmatmul.mubr.f32.gmra.mxu0 %v533
    %v1514 = vpop.f32.mrf.mxu0
    %v1515 = vadd.f32 %v1014, %v1514
    %v1516 = vpop.f32.mrf.mxu0
    %1517 = vdwg.mxu0
    %1518 = vmatprep.subr.mxu0 0.0
    %1519 = vmatpush1.msra.mxu0 %v872
    %1520 = vmatprep.subr.mxu0 0.0
    %1521 = vmatpush1.msra.mxu0 %v865
    %1522 = vmatprep.subr.mxu0 0.0
    %1523 = vmatpush1.msra.mxu0 %v858
    %1524 = vmatprep.subr.mxu0 0.0
    %1525 = vmatpush1.msra.mxu0 %v851
    %1526 = vmatprep.subr.mxu0 0.0
    %1527 = vmatpush1.msra.mxu0 %v844
    %1528 = vmatprep.subr.mxu0 0.0
    %1529 = vmatpush1.msra.mxu0 %v837
    %1530 = vmatprep.subr.mxu0 0.0
    %1531 = vmatpush1.msra.mxu0 %v830
    %1532 = vmatprep.subr.mxu0 0.0
    %1533 = vmatpush1.msra.mxu0 %v823
    %1534 = vmatprep.subr.mxu0 0.0
    %1535 = vmatpush1.msra.mxu0 %v816
    %1536 = vmatprep.subr.mxu0 0.0
    %1537 = vmatpush1.msra.mxu0 %v809
    %1538 = vmatprep.subr.mxu0 0.0
    %1539 = vmatpush1.msra.mxu0 %v802
    %1540 = vmatprep.subr.mxu0 0.0
    %1541 = vmatpush1.msra.mxu0 %v795
    %1542 = vmatprep.subr.mxu0 0.0
    %1543 = vmatpush1.msra.mxu0 %v788
    %1544 = vmatprep.subr.mxu0 0.0
    %1545 = vmatpush1.msra.mxu0 %v781
    %1546 = vmatprep.subr.mxu0 0.0
    %1547 = vmatpush1.msra.mxu0 %v774
    %1548 = vmatprep.subr.mxu0 0.0
    %1549 = vmatpush1.msra.mxu0 %v767
    %1550 = vmatprep.subr.mxu0 0.0
    %1551 = vmatpush2.msra.mxu0 %v984
    %1552 = vmatprep.subr.mxu0 0.0
    %1553 = vmatpush2.msra.mxu0 %v977
    %1554 = vmatprep.subr.mxu0 0.0
    %1555 = vmatpush2.msra.mxu0 %v970
    %1556 = vmatprep.subr.mxu0 0.0
    %1557 = vmatpush2.msra.mxu0 %v963
    %1558 = vmatprep.subr.mxu0 0.0
    %1559 = vmatpush2.msra.mxu0 %v956
    %1560 = vmatprep.subr.mxu0 0.0
    %1561 = vmatpush2.msra.mxu0 %v949
    %1562 = vmatprep.subr.mxu0 0.0
    %1563 = vmatpush2.msra.mxu0 %v942
    %1564 = vmatprep.subr.mxu0 0.0
    %1565 = vmatpush2.msra.mxu0 %v935
    %1566 = vmatprep.subr.mxu0 0.0
    %1567 = vmatpush2.msra.mxu0 %v928
    %1568 = vmatprep.subr.mxu0 0.0
    %1569 = vmatpush2.msra.mxu0 %v921
    %1570 = vmatprep.subr.mxu0 0.0
    %1571 = vmatpush2.msra.mxu0 %v914
    %1572 = vmatprep.subr.mxu0 0.0
    %1573 = vmatpush2.msra.mxu0 %v907
    %1574 = vmatprep.subr.mxu0 0.0
    %1575 = vmatpush2.msra.mxu0 %v900
    %1576 = vmatprep.subr.mxu0 0.0
    %1577 = vmatpush2.msra.mxu0 %v893
    %1578 = vmatprep.subr.mxu0 0.0
    %1579 = vmatpush2.msra.mxu0 %v886
    %1580 = vmatprep.subr.mxu0 0.0
    %1581 = vmatpush2.msra.mxu0 %v879
    %1582 = vmatprep.mubr.f32.mxu0 %v536
    %1583 = vmatmul.mubr.f32.gmra.mxu0 %v535
    %v1584 = vpop.f32.mrf.mxu0
    %v1585 = vadd.f32 %v1515, %v1584
    %v1586 = vpop.f32.mrf.mxu0
    %1587 = vdwg.mxu0
    %v1588 = vtanh.pop %v1160
    %v1589 = vtanh.pop %v1162
    %v1590 = vtanh.pop %v1302
    %v1591 = vtanh.pop %v1304
    %v1592 = vtanh.pop %v1444
    %v1593 = vtanh.pop %v1446
    %v1594 = vtanh.pop %v1585
    %1595 = vst [vmem:[#allocation2] sm:$0xff] %v1588
    %1596 = vst [vmem:[#allocation2 + $0x8] sm:$0xff] %v1589
    %1597 = vst [vmem:[#allocation2 + $0x10] sm:$0xff] %v1590
    %1598 = vst [vmem:[#allocation2 + $0x18] sm:$0xff] %v1591
    %1599 = vst [vmem:[#allocation2 + $0x20] sm:$0xff] %v1592
    %1600 = vst [vmem:[#allocation2 + $0x28] sm:$0xff] %v1593
    %vm1601 = vcmask 130048
    %1602 = vst.msk [vmem:[#allocation2 + $0x30] sm:$0xff] %vm1601, %v1594
    // Predicated region
    $region38: #{mlp_forward.1} parent=1 // pred_check
      _
    $region39: #{mlp_forward.1} parent=1 // pred_check_branch
      %1604 = sbr.rel (0) target = $region41
    $region40: #{mlp_forward.1} parent=1 // pred_region
      %s1606 = ssub.s32 896, 896
      %1607 = vsyncadd [#allocation3], %s1606
      %s1609 = sshll.u32 [#allocation2], 4
      %s1610 = int_to_ptr.vmem [resolvable:$true] %s1609
      %1612 = dma.vmem_to_hbm [thread:$0]  %s1610, 896, %s9, [#allocation3]
    $region41: #{mlp_forward.1} parent=1 // pred_fallthru
      _
    // Predicated region
    $region42: #{mlp_forward.1} parent=1 // pred_check
      _
    $region43: #{mlp_forward.1} parent=1 // pred_check_branch
      %1614 = sbr.rel (0) target = $region45
    $region44: #{mlp_forward.1} parent=1 // pred_region
      %1615 = dma.done [#allocation3], 896
    $region45: #{mlp_forward.1} parent=1 // pred_fallthru
      _
    %1616 = vsyncpa [#allocation3], 1

</llo_original>
